<compile_context>
chip_gen: v5e
topology: v5e:2x2
jax: 0.10.0
libtpu: 0.0.40
codegen_flags: <defaults>
</compile_context>

<pallas_src>
import jax
import jax.numpy as jnp
from jax.experimental import pallas as pl
from jax.experimental.pallas import tpu as pltpu

IN_DIM = 32 * 32          # 1024
H1_PAD, H2_PAD, OUT_PAD = 384, 128, 128   # lane-padded 300 / 100 / 18
OUT_DIM = 18


def _round_up(n, m):
    return (n + m - 1) // m * m


def lenet300_kernel(x_ref, w1_ref, b1_ref, w2_ref, b2_ref, w3_ref, b3_ref, o_ref):
    # x tile: (TB, 1024) f32 -> bf16 for the MXU (cast is free VPU work under MXU slack)
    x = x_ref[...].astype(jnp.bfloat16)

    # Layer 1: (TB, 1024) @ (1024, 384) + (1, 384), ReLU  (cols 300..383 are zero-padded)
    h1 = jnp.dot(x, w1_ref[...], preferred_element_type=jnp.float32) + b1_ref[...]
    h1 = jnp.maximum(h1, 0.0).astype(jnp.bfloat16)

    # Layer 2: (TB, 384) @ (384, 128) + (1, 128), ReLU  (padded rows of W2 are zero)
    h2 = jnp.dot(h1, w2_ref[...], preferred_element_type=jnp.float32) + b2_ref[...]
    h2 = jnp.maximum(h2, 0.0).astype(jnp.bfloat16)

    # Layer 3: (TB, 128) @ (128, 128) + (1, 128) -> lane-dense logits; cols 18..127 are zero
    logits = jnp.dot(h2, w3_ref[...], preferred_element_type=jnp.float32) + b3_ref[...]

    # TODO(synk): log_softmax is computed in the reference but its result is discarded;
    # the module returns raw logits, so we do the same.
    o_ref[...] = logits.astype(o_ref.dtype)


def prepare_params(params):
    """One-time layout prep (do this OUTSIDE the per-call hot path):
    transpose PyTorch (out, in) weights to (in, out), zero-pad widths to lane
    multiples, cast weights to bf16; biases stay f32 (added post-accumulation)."""
    w1, b1, w2, b2, w3, b3 = params

    def pad_to(a, shape):
        return jnp.pad(a, [(0, t - s) for s, t in zip(a.shape, shape)])

    w1p = pad_to(w1.T.astype(jnp.bfloat16), (IN_DIM, H1_PAD))
    w2p = pad_to(w2.T.astype(jnp.bfloat16), (H1_PAD, H2_PAD))
    w3p = pad_to(w3.T.astype(jnp.bfloat16), (H2_PAD, OUT_PAD))
    b1p = pad_to(b1.reshape(1, -1).astype(jnp.float32), (1, H1_PAD))
    b2p = pad_to(b2.reshape(1, -1).astype(jnp.float32), (1, H2_PAD))
    b3p = pad_to(b3.reshape(1, -1).astype(jnp.float32), (1, OUT_PAD))
    return w1p, b1p, w2p, b2p, w3p, b3p


def lenet300_forward(x_nchw, prepared_params, *, tb=256):
    """x_nchw: (B, 1, 32, 32) float32. Returns logits (B, 18)."""
    w1p, b1p, w2p, b2p, w3p, b3p = prepared_params
    B = x_nchw.shape[0]
    x = x_nchw.reshape(B, -1).astype(jnp.float32)  # torch.flatten(x, 1)
    assert x.shape[1] == IN_DIM

    # Batch tile: 256 saturates the 256-wide v6e/v7x MXU (two passes on v5e's 128-wide
    # MXU, still fine). Small batches collapse to a single sublane-aligned tile.
    TB = min(tb, _round_up(B, 8))
    B_pad = _round_up(B, TB)
    if B_pad != B:
        x = jnp.pad(x, ((0, B_pad - B), (0, 0)))

    out = pl.pallas_call(
        lenet300_kernel,
        out_shape=jax.ShapeDtypeStruct((B_pad, OUT_PAD), jnp.float32),
        grid=(B_pad // TB,),
        in_specs=[
            pl.BlockSpec((TB, IN_DIM), lambda i: (i, 0)),       # x: tiled over batch
            pl.BlockSpec((IN_DIM, H1_PAD), lambda i: (0, 0)),   # W1: VMEM-resident
            pl.BlockSpec((1, H1_PAD), lambda i: (0, 0)),        # b1
            pl.BlockSpec((H1_PAD, H2_PAD), lambda i: (0, 0)),   # W2
            pl.BlockSpec((1, H2_PAD), lambda i: (0, 0)),        # b2
            pl.BlockSpec((H2_PAD, OUT_PAD), lambda i: (0, 0)),  # W3
            pl.BlockSpec((1, OUT_PAD), lambda i: (0, 0)),       # b3
        ],
        out_specs=pl.BlockSpec((TB, OUT_PAD), lambda i: (i, 0)),
        compiler_params=pltpu.CompilerParams(
            dimension_semantics=("parallel",),   # shard batch tiles across v7x's 2 TCs
            vmem_limit_bytes=16 << 20,           # actual footprint ~5 MB; leave headroom
        ),
    )(x, w1p, b1p, w2p, b2p, w3p, b3p)

    return out[:B, :OUT_DIM]


def init_params(key):
    """Deterministic init mimicking nn.Linear default (uniform +/- 1/sqrt(fan_in))."""
    dims = [(300, IN_DIM), (100, 300), (OUT_DIM, 100)]
    params = []
    keys = jax.random.split(key, 2 * len(dims))
    for i, (out_d, in_d) in enumerate(dims):
        bound = 1.0 / jnp.sqrt(in_d)
        w = jax.random.uniform(keys[2 * i], (out_d, in_d), jnp.float32, -bound, bound)
        b = jax.random.uniform(keys[2 * i + 1], (out_d,), jnp.float32, -bound, bound)
        params += [w, b]
    return tuple(params)


def reference_forward(x_nchw, params):
    w1, b1, w2, b2, w3, b3 = params
    x = x_nchw.reshape(x_nchw.shape[0], -1)
    h1 = jnp.maximum(x @ w1.T + b1, 0.0)
    h2 = jnp.maximum(h1 @ w2.T + b2, 0.0)
    return h2 @ w3.T + b3


if __name__ == "__main__":
    key = jax.random.PRNGKey(0)
    k_param, k_x = jax.random.split(key)
    params = init_params(k_param)
    prepared = prepare_params(params)  # one-time weight layout prep (not per call)

    # Small batch; spatial must be 32x32 since the first Linear expects 1024 inputs.
    x = jax.random.normal(k_x, (2, 1, 32, 32), dtype=jnp.float32)

    logits = lenet300_forward(x, prepared)
    jax.block_until_ready(logits)

    ref = reference_forward(x, params)
    assert logits.shape == (2, OUT_DIM)
    # bf16 weights/activations vs f32 reference -> loose tolerance (per review guidance).
    assert jnp.allclose(logits, ref, atol=2e-2, rtol=2e-2)

    print("KERNEL_OK")
</pallas_src>

<mosaic_0001>
module attributes {stable_mosaic.version = 11 : i64} {
  func.func @lenet300_kernel(%arg0: i32, %arg1: memref<8x1024xf32, #tpu.memory_space<vmem>>, %arg2: memref<1024x384xbf16, #tpu.memory_space<vmem>>, %arg3: memref<1x384xf32, #tpu.memory_space<vmem>>, %arg4: memref<384x128xbf16, #tpu.memory_space<vmem>>, %arg5: memref<1x128xf32, #tpu.memory_space<vmem>>, %arg6: memref<128x128xbf16, #tpu.memory_space<vmem>>, %arg7: memref<1x128xf32, #tpu.memory_space<vmem>>, %arg8: memref<8x128xf32, #tpu.memory_space<vmem>>) attributes {dimension_semantics = [#tpu.dimension_semantics<parallel>], iteration_bounds = array<i64: 1>, scalar_prefetch = 0 : i64, scratch_operands = 0 : i64, tpu.core_type = #tpu.core_type<tc>, window_params = [{transform_indices = @transform_0, window_bounds = array<i64: 8, 1024>}, {pipeline_mode = #tpu.pipeline_mode<synchronous>, transform_indices = @transform_1, window_bounds = array<i64: 1024, 384>}, {pipeline_mode = #tpu.pipeline_mode<synchronous>, transform_indices = @transform_2, window_bounds = array<i64: 1, 384>}, {pipeline_mode = #tpu.pipeline_mode<synchronous>, transform_indices = @transform_3, window_bounds = array<i64: 384, 128>}, {pipeline_mode = #tpu.pipeline_mode<synchronous>, transform_indices = @transform_4, window_bounds = array<i64: 1, 128>}, {pipeline_mode = #tpu.pipeline_mode<synchronous>, transform_indices = @transform_5, window_bounds = array<i64: 128, 128>}, {pipeline_mode = #tpu.pipeline_mode<synchronous>, transform_indices = @transform_6, window_bounds = array<i64: 1, 128>}, {transform_indices = @transform_7, window_bounds = array<i64: 8, 128>}]} {
    %c0 = arith.constant 0 : index
    %c0_0 = arith.constant 0 : index
    %0 = vector.load %arg1[%c0, %c0_0] : memref<8x1024xf32, #tpu.memory_space<vmem>>, vector<8x1024xf32>
    %1 = arith.truncf %0 : vector<8x1024xf32> to vector<8x1024xbf16>
    %c0_1 = arith.constant 0 : index
    %c0_2 = arith.constant 0 : index
    %2 = vector.load %arg2[%c0_1, %c0_2] : memref<1024x384xbf16, #tpu.memory_space<vmem>>, vector<1024x384xbf16>
    %cst = arith.constant dense<0.000000e+00> : vector<8x384xf32>
    %3 = tpu.matmul %1, %2, %cst {dimension_numbers = #tpu.dot_dimension_numbers<[1], [0], [0], [1], [0, 0, 1, 1], [], []>} : vector<8x1024xbf16>, vector<1024x384xbf16>, vector<8x384xf32> -> vector<8x384xf32>
    %c0_3 = arith.constant 0 : index
    %c0_4 = arith.constant 0 : index
    %4 = vector.load %arg3[%c0_3, %c0_4] : memref<1x384xf32, #tpu.memory_space<vmem>>, vector<1x384xf32>
    %5 = vector.broadcast %4 : vector<1x384xf32> to vector<8x384xf32>
    %6 = arith.addf %3, %5 : vector<8x384xf32>
    %cst_5 = arith.constant 0.000000e+00 : f32
    %7 = vector.broadcast %cst_5 : f32 to vector<8x384xf32>
    %8 = arith.maximumf %6, %7 : vector<8x384xf32>
    %9 = arith.truncf %8 : vector<8x384xf32> to vector<8x384xbf16>
    %c0_6 = arith.constant 0 : index
    %c0_7 = arith.constant 0 : index
    %10 = vector.load %arg4[%c0_6, %c0_7] : memref<384x128xbf16, #tpu.memory_space<vmem>>, vector<384x128xbf16>
    %cst_8 = arith.constant dense<0.000000e+00> : vector<8x128xf32>
    %11 = tpu.matmul %9, %10, %cst_8 {dimension_numbers = #tpu.dot_dimension_numbers<[1], [0], [0], [1], [0, 0, 1, 1], [], []>} : vector<8x384xbf16>, vector<384x128xbf16>, vector<8x128xf32> -> vector<8x128xf32>
    %c0_9 = arith.constant 0 : index
    %c0_10 = arith.constant 0 : index
    %12 = vector.load %arg5[%c0_9, %c0_10] : memref<1x128xf32, #tpu.memory_space<vmem>>, vector<1x128xf32>
    %13 = vector.broadcast %12 : vector<1x128xf32> to vector<8x128xf32>
    %14 = arith.addf %11, %13 : vector<8x128xf32>
    %cst_11 = arith.constant 0.000000e+00 : f32
    %15 = vector.broadcast %cst_11 : f32 to vector<8x128xf32>
    %16 = arith.maximumf %14, %15 : vector<8x128xf32>
    %17 = arith.truncf %16 : vector<8x128xf32> to vector<8x128xbf16>
    %c0_12 = arith.constant 0 : index
    %c0_13 = arith.constant 0 : index
    %18 = vector.load %arg6[%c0_12, %c0_13] : memref<128x128xbf16, #tpu.memory_space<vmem>>, vector<128x128xbf16>
    %cst_14 = arith.constant dense<0.000000e+00> : vector<8x128xf32>
    %19 = tpu.matmul %17, %18, %cst_14 {dimension_numbers = #tpu.dot_dimension_numbers<[1], [0], [0], [1], [0, 0, 1, 1], [], []>} : vector<8x128xbf16>, vector<128x128xbf16>, vector<8x128xf32> -> vector<8x128xf32>
    %c0_15 = arith.constant 0 : index
    %c0_16 = arith.constant 0 : index
    %20 = vector.load %arg7[%c0_15, %c0_16] : memref<1x128xf32, #tpu.memory_space<vmem>>, vector<1x128xf32>
    %21 = vector.broadcast %20 : vector<1x128xf32> to vector<8x128xf32>
    %22 = arith.addf %19, %21 : vector<8x128xf32>
    %c0_17 = arith.constant 0 : index
    %c0_18 = arith.constant 0 : index
    %23 = vector.load %arg8[%c0_17, %c0_18] : memref<8x128xf32, #tpu.memory_space<vmem>>, vector<8x128xf32>
    tpu.vector_store %arg8[%c0_17, %c0_18], %22 {strides = array<i32>} : memref<8x128xf32, #tpu.memory_space<vmem>>, vector<8x128xf32>,
    return
  }
  func.func @transform_0(%arg0: i32) -> (i32, i32) {
    %c0_i32 = arith.constant 0 : i32
    %c0_i32_0 = arith.constant 0 : i32
    return %arg0, %c0_i32 : i32, i32
  }
  func.func @transform_1(%arg0: i32) -> (i32, i32) {
    %c0_i32 = arith.constant 0 : i32
    %c0_i32_0 = arith.constant 0 : i32
    %c0_i32_1 = arith.constant 0 : i32
    return %c0_i32, %c0_i32_0 : i32, i32
  }
  func.func @transform_2(%arg0: i32) -> (i32, i32) {
    %c0_i32 = arith.constant 0 : i32
    %c0_i32_0 = arith.constant 0 : i32
    %c0_i32_1 = arith.constant 0 : i32
    return %c0_i32, %c0_i32_0 : i32, i32
  }
  func.func @transform_3(%arg0: i32) -> (i32, i32) {
    %c0_i32 = arith.constant 0 : i32
    %c0_i32_0 = arith.constant 0 : i32
    %c0_i32_1 = arith.constant 0 : i32
    return %c0_i32, %c0_i32_0 : i32, i32
  }
  func.func @transform_4(%arg0: i32) -> (i32, i32) {
    %c0_i32 = arith.constant 0 : i32
    %c0_i32_0 = arith.constant 0 : i32
    %c0_i32_1 = arith.constant 0 : i32
    return %c0_i32, %c0_i32_0 : i32, i32
  }
  func.func @transform_5(%arg0: i32) -> (i32, i32) {
    %c0_i32 = arith.constant 0 : i32
    %c0_i32_0 = arith.constant 0 : i32
    %c0_i32_1 = arith.constant 0 : i32
    return %c0_i32, %c0_i32_0 : i32, i32
  }
  func.func @transform_6(%arg0: i32) -> (i32, i32) {
    %c0_i32 = arith.constant 0 : i32
    %c0_i32_0 = arith.constant 0 : i32
    %c0_i32_1 = arith.constant 0 : i32
    return %c0_i32, %c0_i32_0 : i32, i32
  }
  func.func @transform_7(%arg0: i32) -> (i32, i32) {
    %c0_i32 = arith.constant 0 : i32
    %c0_i32_0 = arith.constant 0 : i32
    return %arg0, %c0_i32 : i32, i32
  }
}

</mosaic_0001>

<llo_original>
// kernel: tpu_custom_call.1
$region0: #{tpu_custom_call.1}
  #allocation0 [shape = 'u32[]', space=smem, size = 0x4, offset = 0x4, fixed_abs, tag = 'smem constant byte address 0x4 - core index']
  #allocation1 [shape = 'u32[72,128]{1,0:T(1,128)}', space=vmem, size = 0x9000, scoped, tag = 'internal scratch']
  %s0 = inlined_call_operand.hbm [shape: f32[8,1024], index: 0, kind: input, shape index: {}]
  %s1 = inlined_call_operand.hbm [shape: bf16[1024,384], index: 1, kind: input, shape index: {}]
  %s2 = inlined_call_operand.hbm [shape: f32[1,384], index: 2, kind: input, shape index: {}]
  %s3 = inlined_call_operand.hbm [shape: bf16[384,128], index: 3, kind: input, shape index: {}]
  %s4 = inlined_call_operand.vmem [shape: f32[1,128], index: 4, kind: input, shape index: {}]
  %s5 = inlined_call_operand.hbm [shape: bf16[128,128], index: 5, kind: input, shape index: {}]
  %s6 = inlined_call_operand.vmem [shape: f32[1,128], index: 6, kind: input, shape index: {}]
  %s7 = inlined_call_operand.hbm [shape: f32[8,128], index: 7, kind: output, shape index: {}]
  %s8 = sld [smem:[#allocation0]]
  $region58: #{tpu_custom_call.1} parent=0
    _
  %s10 = ssub.s32 1, %s8
  %s11 = scalar_select 0, %s10, %s8
  $region1: #{tpu_custom_call.1} parent=0
    #allocation2 [shape = 'u8[32768]{0}', space=vmem, size = 0x8000, scoped, tag = 'input window, operand 0, single buffered']
    #allocation3 [shape = 's32[1]{0}', space=sflag, size = 0x4, scoped, tag = 'scoped memory for tpu_custom_call.1']
    #allocation4 [shape = 's32[1]{0}', space=sflag, size = 0x4, scoped, tag = 'scoped memory for tpu_custom_call.1']
    #allocation5 [shape = 'u8[786432]{0}', space=vmem, size = 0xc0000, scoped, tag = 'input window, operand 1, single buffered']
    #allocation6 [shape = 's32[1]{0}', space=sflag, size = 0x4, scoped, tag = 'scoped memory for tpu_custom_call.1']
    #allocation7 [shape = 'u8[1536]{0}', space=vmem, size = 0x800, scoped, tag = 'input window, operand 2, single buffered']
    #allocation8 [shape = 'u8[98304]{0}', space=vmem, size = 0x18000, scoped, tag = 'input window, operand 3, single buffered']
    #allocation9 [shape = 's32[1]{0}', space=sflag, size = 0x4, scoped, tag = 'scoped memory for tpu_custom_call.1']
    #allocation10 [shape = 'u8[32768]{0}', space=vmem, size = 0x8000, scoped, tag = 'input window, operand 5, single buffered']
    #allocation11 [shape = 'u8[4096]{0}', space=vmem, size = 0x1000, scoped, tag = 'output window, operand 0, single buffered']
    %12 = vsyncpa [#allocation3], 0
    %13 = vsyncpa [#allocation6], 0
    %14 = vsyncpa [#allocation9], 0
    %15 = vsyncpa [#allocation4], 0
    // Predicated region
    $region2: #{tpu_custom_call.1} parent=1 // pred_check
      _
    $region3: #{tpu_custom_call.1} parent=1 // pred_check_branch
      %17 = sbr.rel (0) target = $region5
    $region4: #{tpu_custom_call.1} parent=1 // pred_region
      %19 = vsyncadd [#allocation3], 0
      %s21 = sshll.u32 %s0, 4
      %s22 = int_to_ptr.hbm [resolvable:$true] %s21
      %s23 = sshll.u32 [#allocation2], 4
      %s24 = int_to_ptr.vmem [resolvable:$true] %s23
      %26 = dma.hbm_to_vmem [thread:$0]  %s22, 1024, %s24, [#allocation3]
    $region5: #{tpu_custom_call.1} parent=1 // pred_fallthru
      _
    // Predicated region
    $region6: #{tpu_custom_call.1} parent=1 // pred_check
      _
    $region7: #{tpu_custom_call.1} parent=1 // pred_check_branch
      %28 = sbr.rel (0) target = $region9
    $region8: #{tpu_custom_call.1} parent=1 // pred_region
      %30 = vsyncadd [#allocation6], 0
      %s31 = sshll.u32 %s1, 4
      %s32 = int_to_ptr.hbm [resolvable:$true] %s31
      %s33 = sshll.u32 [#allocation5], 4
      %s34 = int_to_ptr.vmem [resolvable:$true] %s33
      %39 = dma.hbm_to_vmem [thread:$0]  %s32, 24576, %s34, [#allocation6], 192, 192, 12
    $region9: #{tpu_custom_call.1} parent=1 // pred_fallthru
      _
    // Predicated region
    $region10: #{tpu_custom_call.1} parent=1 // pred_check
      _
    $region11: #{tpu_custom_call.1} parent=1 // pred_check_branch
      %41 = sbr.rel (0) target = $region13
    $region12: #{tpu_custom_call.1} parent=1 // pred_region
      %43 = vsyncadd [#allocation6], 0
      %s45 = sshll.u32 %s2, 4
      %s46 = int_to_ptr.hbm [resolvable:$true] %s45
      %s47 = sshll.u32 [#allocation7], 4
      %s48 = int_to_ptr.vmem [resolvable:$true] %s47
      %50 = dma.hbm_to_vmem [thread:$0]  %s46, 48, %s48, [#allocation6]
    $region13: #{tpu_custom_call.1} parent=1 // pred_fallthru
      _
    // Predicated region
    $region14: #{tpu_custom_call.1} parent=1 // pred_check
      _
    $region15: #{tpu_custom_call.1} parent=1 // pred_check_branch
      %52 = sbr.rel (0) target = $region17
    $region16: #{tpu_custom_call.1} parent=1 // pred_region
      %54 = vsyncadd [#allocation9], 0
      %s55 = sshll.u32 %s3, 4
      %s56 = int_to_ptr.hbm [resolvable:$true] %s55
      %s57 = sshll.u32 [#allocation8], 4
      %s58 = int_to_ptr.vmem [resolvable:$true] %s57
      %63 = dma.hbm_to_vmem [thread:$0]  %s56, 3072, %s58, [#allocation9], 64, 64, 4
    $region17: #{tpu_custom_call.1} parent=1 // pred_fallthru
      _
    // Predicated region
    $region18: #{tpu_custom_call.1} parent=1 // pred_check
      _
    $region19: #{tpu_custom_call.1} parent=1 // pred_check_branch
      %65 = sbr.rel (0) target = $region21
    $region20: #{tpu_custom_call.1} parent=1 // pred_region
      _
    $region21: #{tpu_custom_call.1} parent=1 // pred_fallthru
      _
    // Predicated region
    $region22: #{tpu_custom_call.1} parent=1 // pred_check
      _
    $region23: #{tpu_custom_call.1} parent=1 // pred_check_branch
      %67 = sbr.rel (0) target = $region25
    $region24: #{tpu_custom_call.1} parent=1 // pred_region
      %69 = vsyncadd [#allocation9], 0
      %s70 = sshll.u32 %s5, 4
      %s71 = int_to_ptr.hbm [resolvable:$true] %s70
      %s72 = sshll.u32 [#allocation10], 4
      %s73 = int_to_ptr.vmem [resolvable:$true] %s72
      %78 = dma.hbm_to_vmem [thread:$0]  %s71, 1024, %s73, [#allocation9], 64, 64, 4
    $region25: #{tpu_custom_call.1} parent=1 // pred_fallthru
      _
    // Predicated region
    $region26: #{tpu_custom_call.1} parent=1 // pred_check
      _
    $region27: #{tpu_custom_call.1} parent=1 // pred_check_branch
      %80 = sbr.rel (0) target = $region29
    $region28: #{tpu_custom_call.1} parent=1 // pred_region
      _
    $region29: #{tpu_custom_call.1} parent=1 // pred_fallthru
      _
    // Predicated region
    $region30: #{tpu_custom_call.1} parent=1 // pred_check
      _
    $region31: #{tpu_custom_call.1} parent=1 // pred_check_branch
      %82 = sbr.rel (0) target = $region33
    $region32: #{tpu_custom_call.1} parent=1 // pred_region
      %84 = dma.done [#allocation3], 1024
    $region33: #{tpu_custom_call.1} parent=1 // pred_fallthru
      _
    // Predicated region
    $region34: #{tpu_custom_call.1} parent=1 // pred_check
      _
    $region35: #{tpu_custom_call.1} parent=1 // pred_check_branch
      %86 = sbr.rel (0) target = $region37
    $region36: #{tpu_custom_call.1} parent=1 // pred_region
      %88 = dma.done [#allocation6], 24576
    $region37: #{tpu_custom_call.1} parent=1 // pred_fallthru
      _
    // Predicated region
    $region38: #{tpu_custom_call.1} parent=1 // pred_check
      _
    $region39: #{tpu_custom_call.1} parent=1 // pred_check_branch
      %90 = sbr.rel (0) target = $region41
    $region40: #{tpu_custom_call.1} parent=1 // pred_region
      %92 = dma.done [#allocation6], 48
    $region41: #{tpu_custom_call.1} parent=1 // pred_fallthru
      _
    // Predicated region
    $region42: #{tpu_custom_call.1} parent=1 // pred_check
      _
    $region43: #{tpu_custom_call.1} parent=1 // pred_check_branch
      %94 = sbr.rel (0) target = $region45
    $region44: #{tpu_custom_call.1} parent=1 // pred_region
      %96 = dma.done [#allocation9], 3072
    $region45: #{tpu_custom_call.1} parent=1 // pred_fallthru
      _
    // Predicated region
    $region46: #{tpu_custom_call.1} parent=1 // pred_check
      _
    $region47: #{tpu_custom_call.1} parent=1 // pred_check_branch
      %98 = sbr.rel (0) target = $region49
    $region48: #{tpu_custom_call.1} parent=1 // pred_region
      %100 = dma.done [#allocation9], 1024
    $region49: #{tpu_custom_call.1} parent=1 // pred_fallthru
      _
    %v101 = vld [vmem:[#allocation2] sm:$0xff]
    %v102 = vld [vmem:[#allocation2 + $0x8] sm:$0xff]
    %v103 = vld [vmem:[#allocation2 + $0x10] sm:$0xff]
    %v104 = vld [vmem:[#allocation2 + $0x18] sm:$0xff]
    %v105 = vld [vmem:[#allocation2 + $0x20] sm:$0xff]
    %v106 = vld [vmem:[#allocation2 + $0x28] sm:$0xff]
    %v107 = vld [vmem:[#allocation2 + $0x30] sm:$0xff]
    %v108 = vld [vmem:[#allocation2 + $0x38] sm:$0xff]
    %v109 = vpack.c.bf16 %v101, %v101
    %v110 = vpack.c.bf16 %v102, %v102
    %v111 = vpack.c.bf16 %v103, %v103
    %v112 = vpack.c.bf16 %v104, %v104
    %v113 = vpack.c.bf16 %v105, %v105
    %v114 = vpack.c.bf16 %v106, %v106
    %v115 = vpack.c.bf16 %v107, %v107
    %v116 = vpack.c.bf16 %v108, %v108
    %v117 = vld [vmem:[#allocation5] sm:$0xff]
    %v118 = vld [vmem:[#allocation5 + $0x8] sm:$0xf]
    %v119 = vld [vmem:[#allocation5 + $0xc] sm:$0xff]
    %v120 = vld [vmem:[#allocation5 + $0x14] sm:$0xf]
    %v121 = vld [vmem:[#allocation5 + $0x18] sm:$0xff]
    %v122 = vld [vmem:[#allocation5 + $0x20] sm:$0xf]
    %v123 = vld [vmem:[#allocation5 + $0x24] sm:$0xff]
    %v124 = vld [vmem:[#allocation5 + $0x2c] sm:$0xf]
    %v125 = vld [vmem:[#allocation5 + $0x30] sm:$0xff]
    %v126 = vld [vmem:[#allocation5 + $0x38] sm:$0xf]
    %v127 = vld [vmem:[#allocation5 + $0x3c] sm:$0xff]
    %v128 = vld [vmem:[#allocation5 + $0x44] sm:$0xf]
    %v129 = vld [vmem:[#allocation5 + $0x48] sm:$0xff]
    %v130 = vld [vmem:[#allocation5 + $0x50] sm:$0xf]
    %v131 = vld [vmem:[#allocation5 + $0x54] sm:$0xff]
    %v132 = vld [vmem:[#allocation5 + $0x5c] sm:$0xf]
    %v133 = vld [vmem:[#allocation5 + $0x60] sm:$0xff]
    %v134 = vld [vmem:[#allocation5 + $0x68] sm:$0xf]
    %v135 = vld [vmem:[#allocation5 + $0x6c] sm:$0xff]
    %v136 = vld [vmem:[#allocation5 + $0x74] sm:$0xf]
    %v137 = vld [vmem:[#allocation5 + $0x78] sm:$0xff]
    %v138 = vld [vmem:[#allocation5 + $0x80] sm:$0xf]
    %v139 = vld [vmem:[#allocation5 + $0x84] sm:$0xff]
    %v140 = vld [vmem:[#allocation5 + $0x8c] sm:$0xf]
    %v141 = vld [vmem:[#allocation5 + $0x90] sm:$0xff]
    %v142 = vld [vmem:[#allocation5 + $0x98] sm:$0xf]
    %v143 = vld [vmem:[#allocation5 + $0x9c] sm:$0xff]
    %v144 = vld [vmem:[#allocation5 + $0xa4] sm:$0xf]
    %v145 = vld [vmem:[#allocation5 + $0xa8] sm:$0xff]
    %v146 = vld [vmem:[#allocation5 + $0xb0] sm:$0xf]
    %v147 = vld [vmem:[#allocation5 + $0xb4] sm:$0xff]
    %v148 = vld [vmem:[#allocation5 + $0xbc] sm:$0xf]
    %v149 = vld [vmem:[#allocation5 + $0xc0] sm:$0xff]
    %v150 = vld [vmem:[#allocation5 + $0xc8] sm:$0xf]
    %v151 = vld [vmem:[#allocation5 + $0xcc] sm:$0xff]
    %v152 = vld [vmem:[#allocation5 + $0xd4] sm:$0xf]
    %v153 = vld [vmem:[#allocation5 + $0xd8] sm:$0xff]
    %v154 = vld [vmem:[#allocation5 + $0xe0] sm:$0xf]
    %v155 = vld [vmem:[#allocation5 + $0xe4] sm:$0xff]
    %v156 = vld [vmem:[#allocation5 + $0xec] sm:$0xf]
    %v157 = vld [vmem:[#allocation5 + $0xf0] sm:$0xff]
    %v158 = vld [vmem:[#allocation5 + $0xf8] sm:$0xf]
    %v159 = vld [vmem:[#allocation5 + $0xfc] sm:$0xff]
    %v160 = vld [vmem:[#allocation5 + $0x104] sm:$0xf]
    %v161 = vld [vmem:[#allocation5 + $0x108] sm:$0xff]
    %v162 = vld [vmem:[#allocation5 + $0x110] sm:$0xf]
    %v163 = vld [vmem:[#allocation5 + $0x114] sm:$0xff]
    %v164 = vld [vmem:[#allocation5 + $0x11c] sm:$0xf]
    %v165 = vld [vmem:[#allocation5 + $0x120] sm:$0xff]
    %v166 = vld [vmem:[#allocation5 + $0x128] sm:$0xf]
    %v167 = vld [vmem:[#allocation5 + $0x12c] sm:$0xff]
    %v168 = vld [vmem:[#allocation5 + $0x134] sm:$0xf]
    %v169 = vld [vmem:[#allocation5 + $0x138] sm:$0xff]
    %v170 = vld [vmem:[#allocation5 + $0x140] sm:$0xf]
    %v171 = vld [vmem:[#allocation5 + $0x144] sm:$0xff]
    %v172 = vld [vmem:[#allocation5 + $0x14c] sm:$0xf]
    %v173 = vld [vmem:[#allocation5 + $0x150] sm:$0xff]
    %v174 = vld [vmem:[#allocation5 + $0x158] sm:$0xf]
    %v175 = vld [vmem:[#allocation5 + $0x15c] sm:$0xff]
    %v176 = vld [vmem:[#allocation5 + $0x164] sm:$0xf]
    %v177 = vld [vmem:[#allocation5 + $0x168] sm:$0xff]
    %v178 = vld [vmem:[#allocation5 + $0x170] sm:$0xf]
    %v179 = vld [vmem:[#allocation5 + $0x174] sm:$0xff]
    %v180 = vld [vmem:[#allocation5 + $0x17c] sm:$0xf]
    %v181 = vld [vmem:[#allocation5 + $0x180] sm:$0xff]
    %v182 = vld [vmem:[#allocation5 + $0x188] sm:$0xf]
    %v183 = vld [vmem:[#allocation5 + $0x18c] sm:$0xff]
    %v184 = vld [vmem:[#allocation5 + $0x194] sm:$0xf]
    %v185 = vld [vmem:[#allocation5 + $0x198] sm:$0xff]
    %v186 = vld [vmem:[#allocation5 + $0x1a0] sm:$0xf]
    %v187 = vld [vmem:[#allocation5 + $0x1a4] sm:$0xff]
    %v188 = vld [vmem:[#allocation5 + $0x1ac] sm:$0xf]
    %v189 = vld [vmem:[#allocation5 + $0x1b0] sm:$0xff]
    %v190 = vld [vmem:[#allocation5 + $0x1b8] sm:$0xf]
    %v191 = vld [vmem:[#allocation5 + $0x1bc] sm:$0xff]
    %v192 = vld [vmem:[#allocation5 + $0x1c4] sm:$0xf]
    %v193 = vld [vmem:[#allocation5 + $0x1c8] sm:$0xff]
    %v194 = vld [vmem:[#allocation5 + $0x1d0] sm:$0xf]
    %v195 = vld [vmem:[#allocation5 + $0x1d4] sm:$0xff]
    %v196 = vld [vmem:[#allocation5 + $0x1dc] sm:$0xf]
    %v197 = vld [vmem:[#allocation5 + $0x1e0] sm:$0xff]
    %v198 = vld [vmem:[#allocation5 + $0x1e8] sm:$0xf]
    %v199 = vld [vmem:[#allocation5 + $0x1ec] sm:$0xff]
    %v200 = vld [vmem:[#allocation5 + $0x1f4] sm:$0xf]
    %v201 = vld [vmem:[#allocation5 + $0x1f8] sm:$0xff]
    %v202 = vld [vmem:[#allocation5 + $0x200] sm:$0xf]
    %v203 = vld [vmem:[#allocation5 + $0x204] sm:$0xff]
    %v204 = vld [vmem:[#allocation5 + $0x20c] sm:$0xf]
    %v205 = vld [vmem:[#allocation5 + $0x210] sm:$0xff]
    %v206 = vld [vmem:[#allocation5 + $0x218] sm:$0xf]
    %v207 = vld [vmem:[#allocation5 + $0x21c] sm:$0xff]
    %v208 = vld [vmem:[#allocation5 + $0x224] sm:$0xf]
    %v209 = vld [vmem:[#allocation5 + $0x228] sm:$0xff]
    %v210 = vld [vmem:[#allocation5 + $0x230] sm:$0xf]
    %v211 = vld [vmem:[#allocation5 + $0x234] sm:$0xff]
    %v212 = vld [vmem:[#allocation5 + $0x23c] sm:$0xf]
    %v213 = vld [vmem:[#allocation5 + $0x240] sm:$0xff]
    %v214 = vld [vmem:[#allocation5 + $0x248] sm:$0xf]
    %v215 = vld [vmem:[#allocation5 + $0x24c] sm:$0xff]
    %v216 = vld [vmem:[#allocation5 + $0x254] sm:$0xf]
    %v217 = vld [vmem:[#allocation5 + $0x258] sm:$0xff]
    %v218 = vld [vmem:[#allocation5 + $0x260] sm:$0xf]
    %v219 = vld [vmem:[#allocation5 + $0x264] sm:$0xff]
    %v220 = vld [vmem:[#allocation5 + $0x26c] sm:$0xf]
    %v221 = vld [vmem:[#allocation5 + $0x270] sm:$0xff]
    %v222 = vld [vmem:[#allocation5 + $0x278] sm:$0xf]
    %v223 = vld [vmem:[#allocation5 + $0x27c] sm:$0xff]
    %v224 = vld [vmem:[#allocation5 + $0x284] sm:$0xf]
    %v225 = vld [vmem:[#allocation5 + $0x288] sm:$0xff]
    %v226 = vld [vmem:[#allocation5 + $0x290] sm:$0xf]
    %v227 = vld [vmem:[#allocation5 + $0x294] sm:$0xff]
    %v228 = vld [vmem:[#allocation5 + $0x29c] sm:$0xf]
    %v229 = vld [vmem:[#allocation5 + $0x2a0] sm:$0xff]
    %v230 = vld [vmem:[#allocation5 + $0x2a8] sm:$0xf]
    %v231 = vld [vmem:[#allocation5 + $0x2ac] sm:$0xff]
    %v232 = vld [vmem:[#allocation5 + $0x2b4] sm:$0xf]
    %v233 = vld [vmem:[#allocation5 + $0x2b8] sm:$0xff]
    %v234 = vld [vmem:[#allocation5 + $0x2c0] sm:$0xf]
    %v235 = vld [vmem:[#allocation5 + $0x2c4] sm:$0xff]
    %v236 = vld [vmem:[#allocation5 + $0x2cc] sm:$0xf]
    %v237 = vld [vmem:[#allocation5 + $0x2d0] sm:$0xff]
    %v238 = vld [vmem:[#allocation5 + $0x2d8] sm:$0xf]
    %v239 = vld [vmem:[#allocation5 + $0x2dc] sm:$0xff]
    %v240 = vld [vmem:[#allocation5 + $0x2e4] sm:$0xf]
    %v241 = vld [vmem:[#allocation5 + $0x2e8] sm:$0xff]
    %v242 = vld [vmem:[#allocation5 + $0x2f0] sm:$0xf]
    %v243 = vld [vmem:[#allocation5 + $0x2f4] sm:$0xff]
    %v244 = vld [vmem:[#allocation5 + $0x2fc] sm:$0xf]
    %v245 = vld [vmem:[#allocation5 + $0x300] sm:$0xff]
    %v246 = vld [vmem:[#allocation5 + $0x308] sm:$0xf]
    %v247 = vld [vmem:[#allocation5 + $0x30c] sm:$0xff]
    %v248 = vld [vmem:[#allocation5 + $0x314] sm:$0xf]
    %v249 = vld [vmem:[#allocation5 + $0x318] sm:$0xff]
    %v250 = vld [vmem:[#allocation5 + $0x320] sm:$0xf]
    %v251 = vld [vmem:[#allocation5 + $0x324] sm:$0xff]
    %v252 = vld [vmem:[#allocation5 + $0x32c] sm:$0xf]
    %v253 = vld [vmem:[#allocation5 + $0x330] sm:$0xff]
    %v254 = vld [vmem:[#allocation5 + $0x338] sm:$0xf]
    %v255 = vld [vmem:[#allocation5 + $0x33c] sm:$0xff]
    %v256 = vld [vmem:[#allocation5 + $0x344] sm:$0xf]
    %v257 = vld [vmem:[#allocation5 + $0x348] sm:$0xff]
    %v258 = vld [vmem:[#allocation5 + $0x350] sm:$0xf]
    %v259 = vld [vmem:[#allocation5 + $0x354] sm:$0xff]
    %v260 = vld [vmem:[#allocation5 + $0x35c] sm:$0xf]
    %v261 = vld [vmem:[#allocation5 + $0x360] sm:$0xff]
    %v262 = vld [vmem:[#allocation5 + $0x368] sm:$0xf]
    %v263 = vld [vmem:[#allocation5 + $0x36c] sm:$0xff]
    %v264 = vld [vmem:[#allocation5 + $0x374] sm:$0xf]
    %v265 = vld [vmem:[#allocation5 + $0x378] sm:$0xff]
    %v266 = vld [vmem:[#allocation5 + $0x380] sm:$0xf]
    %v267 = vld [vmem:[#allocation5 + $0x384] sm:$0xff]
    %v268 = vld [vmem:[#allocation5 + $0x38c] sm:$0xf]
    %v269 = vld [vmem:[#allocation5 + $0x390] sm:$0xff]
    %v270 = vld [vmem:[#allocation5 + $0x398] sm:$0xf]
    %v271 = vld [vmem:[#allocation5 + $0x39c] sm:$0xff]
    %v272 = vld [vmem:[#allocation5 + $0x3a4] sm:$0xf]
    %v273 = vld [vmem:[#allocation5 + $0x3a8] sm:$0xff]
    %v274 = vld [vmem:[#allocation5 + $0x3b0] sm:$0xf]
    %v275 = vld [vmem:[#allocation5 + $0x3b4] sm:$0xff]
    %v276 = vld [vmem:[#allocation5 + $0x3bc] sm:$0xf]
    %v277 = vld [vmem:[#allocation5 + $0x3c0] sm:$0xff]
    %v278 = vld [vmem:[#allocation5 + $0x3c8] sm:$0xf]
    %v279 = vld [vmem:[#allocation5 + $0x3cc] sm:$0xff]
    %v280 = vld [vmem:[#allocation5 + $0x3d4] sm:$0xf]
    %v281 = vld [vmem:[#allocation5 + $0x3d8] sm:$0xff]
    %v282 = vld [vmem:[#allocation5 + $0x3e0] sm:$0xf]
    %v283 = vld [vmem:[#allocation5 + $0x3e4] sm:$0xff]
    %v284 = vld [vmem:[#allocation5 + $0x3ec] sm:$0xf]
    %v285 = vld [vmem:[#allocation5 + $0x3f0] sm:$0xff]
    %v286 = vld [vmem:[#allocation5 + $0x3f8] sm:$0xf]
    %v287 = vld [vmem:[#allocation5 + $0x3fc] sm:$0xff]
    %v288 = vld [vmem:[#allocation5 + $0x404] sm:$0xf]
    %v289 = vld [vmem:[#allocation5 + $0x408] sm:$0xff]
    %v290 = vld [vmem:[#allocation5 + $0x410] sm:$0xf]
    %v291 = vld [vmem:[#allocation5 + $0x414] sm:$0xff]
    %v292 = vld [vmem:[#allocation5 + $0x41c] sm:$0xf]
    %v293 = vld [vmem:[#allocation5 + $0x420] sm:$0xff]
    %v294 = vld [vmem:[#allocation5 + $0x428] sm:$0xf]
    %v295 = vld [vmem:[#allocation5 + $0x42c] sm:$0xff]
    %v296 = vld [vmem:[#allocation5 + $0x434] sm:$0xf]
    %v297 = vld [vmem:[#allocation5 + $0x438] sm:$0xff]
    %v298 = vld [vmem:[#allocation5 + $0x440] sm:$0xf]
    %v299 = vld [vmem:[#allocation5 + $0x444] sm:$0xff]
    %v300 = vld [vmem:[#allocation5 + $0x44c] sm:$0xf]
    %v301 = vld [vmem:[#allocation5 + $0x450] sm:$0xff]
    %v302 = vld [vmem:[#allocation5 + $0x458] sm:$0xf]
    %v303 = vld [vmem:[#allocation5 + $0x45c] sm:$0xff]
    %v304 = vld [vmem:[#allocation5 + $0x464] sm:$0xf]
    %v305 = vld [vmem:[#allocation5 + $0x468] sm:$0xff]
    %v306 = vld [vmem:[#allocation5 + $0x470] sm:$0xf]
    %v307 = vld [vmem:[#allocation5 + $0x474] sm:$0xff]
    %v308 = vld [vmem:[#allocation5 + $0x47c] sm:$0xf]
    %v309 = vld [vmem:[#allocation5 + $0x480] sm:$0xff]
    %v310 = vld [vmem:[#allocation5 + $0x488] sm:$0xf]
    %v311 = vld [vmem:[#allocation5 + $0x48c] sm:$0xff]
    %v312 = vld [vmem:[#allocation5 + $0x494] sm:$0xf]
    %v313 = vld [vmem:[#allocation5 + $0x498] sm:$0xff]
    %v314 = vld [vmem:[#allocation5 + $0x4a0] sm:$0xf]
    %v315 = vld [vmem:[#allocation5 + $0x4a4] sm:$0xff]
    %v316 = vld [vmem:[#allocation5 + $0x4ac] sm:$0xf]
    %v317 = vld [vmem:[#allocation5 + $0x4b0] sm:$0xff]
    %v318 = vld [vmem:[#allocation5 + $0x4b8] sm:$0xf]
    %v319 = vld [vmem:[#allocation5 + $0x4bc] sm:$0xff]
    %v320 = vld [vmem:[#allocation5 + $0x4c4] sm:$0xf]
    %v321 = vld [vmem:[#allocation5 + $0x4c8] sm:$0xff]
    %v322 = vld [vmem:[#allocation5 + $0x4d0] sm:$0xf]
    %v323 = vld [vmem:[#allocation5 + $0x4d4] sm:$0xff]
    %v324 = vld [vmem:[#allocation5 + $0x4dc] sm:$0xf]
    %v325 = vld [vmem:[#allocation5 + $0x4e0] sm:$0xff]
    %v326 = vld [vmem:[#allocation5 + $0x4e8] sm:$0xf]
    %v327 = vld [vmem:[#allocation5 + $0x4ec] sm:$0xff]
    %v328 = vld [vmem:[#allocation5 + $0x4f4] sm:$0xf]
    %v329 = vld [vmem:[#allocation5 + $0x4f8] sm:$0xff]
    %v330 = vld [vmem:[#allocation5 + $0x500] sm:$0xf]
    %v331 = vld [vmem:[#allocation5 + $0x504] sm:$0xff]
    %v332 = vld [vmem:[#allocation5 + $0x50c] sm:$0xf]
    %v333 = vld [vmem:[#allocation5 + $0x510] sm:$0xff]
    %v334 = vld [vmem:[#allocation5 + $0x518] sm:$0xf]
    %v335 = vld [vmem:[#allocation5 + $0x51c] sm:$0xff]
    %v336 = vld [vmem:[#allocation5 + $0x524] sm:$0xf]
    %v337 = vld [vmem:[#allocation5 + $0x528] sm:$0xff]
    %v338 = vld [vmem:[#allocation5 + $0x530] sm:$0xf]
    %v339 = vld [vmem:[#allocation5 + $0x534] sm:$0xff]
    %v340 = vld [vmem:[#allocation5 + $0x53c] sm:$0xf]
    %v341 = vld [vmem:[#allocation5 + $0x540] sm:$0xff]
    %v342 = vld [vmem:[#allocation5 + $0x548] sm:$0xf]
    %v343 = vld [vmem:[#allocation5 + $0x54c] sm:$0xff]
    %v344 = vld [vmem:[#allocation5 + $0x554] sm:$0xf]
    %v345 = vld [vmem:[#allocation5 + $0x558] sm:$0xff]
    %v346 = vld [vmem:[#allocation5 + $0x560] sm:$0xf]
    %v347 = vld [vmem:[#allocation5 + $0x564] sm:$0xff]
    %v348 = vld [vmem:[#allocation5 + $0x56c] sm:$0xf]
    %v349 = vld [vmem:[#allocation5 + $0x570] sm:$0xff]
    %v350 = vld [vmem:[#allocation5 + $0x578] sm:$0xf]
    %v351 = vld [vmem:[#allocation5 + $0x57c] sm:$0xff]
    %v352 = vld [vmem:[#allocation5 + $0x584] sm:$0xf]
    %v353 = vld [vmem:[#allocation5 + $0x588] sm:$0xff]
    %v354 = vld [vmem:[#allocation5 + $0x590] sm:$0xf]
    %v355 = vld [vmem:[#allocation5 + $0x594] sm:$0xff]
    %v356 = vld [vmem:[#allocation5 + $0x59c] sm:$0xf]
    %v357 = vld [vmem:[#allocation5 + $0x5a0] sm:$0xff]
    %v358 = vld [vmem:[#allocation5 + $0x5a8] sm:$0xf]
    %v359 = vld [vmem:[#allocation5 + $0x5ac] sm:$0xff]
    %v360 = vld [vmem:[#allocation5 + $0x5b4] sm:$0xf]
    %v361 = vld [vmem:[#allocation5 + $0x5b8] sm:$0xff]
    %v362 = vld [vmem:[#allocation5 + $0x5c0] sm:$0xf]
    %v363 = vld [vmem:[#allocation5 + $0x5c4] sm:$0xff]
    %v364 = vld [vmem:[#allocation5 + $0x5cc] sm:$0xf]
    %v365 = vld [vmem:[#allocation5 + $0x5d0] sm:$0xff]
    %v366 = vld [vmem:[#allocation5 + $0x5d8] sm:$0xf]
    %v367 = vld [vmem:[#allocation5 + $0x5dc] sm:$0xff]
    %v368 = vld [vmem:[#allocation5 + $0x5e4] sm:$0xf]
    %v369 = vld [vmem:[#allocation5 + $0x5e8] sm:$0xff]
    %v370 = vld [vmem:[#allocation5 + $0x5f0] sm:$0xf]
    %v371 = vld [vmem:[#allocation5 + $0x5f4] sm:$0xff]
    %v372 = vld [vmem:[#allocation5 + $0x5fc] sm:$0xf]
    %v373 = vld [vmem:[#allocation7] sm:$0x7]
    %v375 = vperm.slane %v373, 0
    %v376 = vperm.slane %v373, 1
    %v377 = vperm.slane %v373, 2
    %v637 = vunpack.c.l.b16 %v117
    %v638 = vunpack.c.h.b16 %v117
    %v639 = vunpack.c.l.b16 %v118
    %v640 = vunpack.c.l.b16 %v119
    %v641 = vunpack.c.h.b16 %v119
    %v642 = vunpack.c.l.b16 %v120
    %v643 = vunpack.c.l.b16 %v121
    %v644 = vunpack.c.h.b16 %v121
    %v645 = vunpack.c.l.b16 %v122
    %v646 = vunpack.c.l.b16 %v123
    %v647 = vunpack.c.h.b16 %v123
    %v648 = vunpack.c.l.b16 %v124
    %v649 = vunpack.c.l.b16 %v125
    %v650 = vunpack.c.h.b16 %v125
    %v651 = vunpack.c.l.b16 %v126
    %v652 = vunpack.c.l.b16 %v127
    %v653 = vunpack.c.h.b16 %v127
    %v654 = vunpack.c.l.b16 %v128
    %v655 = vunpack.c.l.b16 %v129
    %v656 = vunpack.c.h.b16 %v129
    %v657 = vunpack.c.l.b16 %v130
    %v658 = vunpack.c.l.b16 %v131
    %v659 = vunpack.c.h.b16 %v131
    %v660 = vunpack.c.l.b16 %v132
    %v661 = vunpack.c.l.b16 %v133
    %v662 = vunpack.c.h.b16 %v133
    %v663 = vunpack.c.l.b16 %v134
    %v664 = vunpack.c.l.b16 %v135
    %v665 = vunpack.c.h.b16 %v135
    %v666 = vunpack.c.l.b16 %v136
    %v667 = vunpack.c.l.b16 %v137
    %v668 = vunpack.c.h.b16 %v137
    %v669 = vunpack.c.l.b16 %v138
    %v670 = vunpack.c.l.b16 %v139
    %v671 = vunpack.c.h.b16 %v139
    %v672 = vunpack.c.l.b16 %v140
    %v673 = vunpack.c.l.b16 %v141
    %v674 = vunpack.c.h.b16 %v141
    %v675 = vunpack.c.l.b16 %v142
    %v676 = vunpack.c.l.b16 %v143
    %v677 = vunpack.c.h.b16 %v143
    %v678 = vunpack.c.l.b16 %v144
    %v679 = vunpack.c.l.b16 %v145
    %v680 = vunpack.c.h.b16 %v145
    %v681 = vunpack.c.l.b16 %v146
    %v682 = vunpack.c.l.b16 %v147
    %v683 = vunpack.c.h.b16 %v147
    %v684 = vunpack.c.l.b16 %v148
    %v685 = vunpack.c.l.b16 %v149
    %v686 = vunpack.c.h.b16 %v149
    %v687 = vunpack.c.l.b16 %v150
    %v688 = vunpack.c.l.b16 %v151
    %v689 = vunpack.c.h.b16 %v151
    %v690 = vunpack.c.l.b16 %v152
    %v691 = vunpack.c.l.b16 %v153
    %v692 = vunpack.c.h.b16 %v153
    %v693 = vunpack.c.l.b16 %v154
    %v694 = vunpack.c.l.b16 %v155
    %v695 = vunpack.c.h.b16 %v155
    %v696 = vunpack.c.l.b16 %v156
    %v697 = vunpack.c.l.b16 %v157
    %v698 = vunpack.c.h.b16 %v157
    %v699 = vunpack.c.l.b16 %v158
    %v700 = vunpack.c.l.b16 %v159
    %v701 = vunpack.c.h.b16 %v159
    %v702 = vunpack.c.l.b16 %v160
    %v703 = vunpack.c.l.b16 %v161
    %v704 = vunpack.c.h.b16 %v161
    %v705 = vunpack.c.l.b16 %v162
    %v706 = vunpack.c.l.b16 %v163
    %v707 = vunpack.c.h.b16 %v163
    %v708 = vunpack.c.l.b16 %v164
    %v709 = vunpack.c.l.b16 %v165
    %v710 = vunpack.c.h.b16 %v165
    %v711 = vunpack.c.l.b16 %v166
    %v712 = vunpack.c.l.b16 %v167
    %v713 = vunpack.c.h.b16 %v167
    %v714 = vunpack.c.l.b16 %v168
    %v715 = vunpack.c.l.b16 %v169
    %v716 = vunpack.c.h.b16 %v169
    %v717 = vunpack.c.l.b16 %v170
    %v718 = vunpack.c.l.b16 %v171
    %v719 = vunpack.c.h.b16 %v171
    %v720 = vunpack.c.l.b16 %v172
    %v721 = vunpack.c.l.b16 %v173
    %v722 = vunpack.c.h.b16 %v173
    %v723 = vunpack.c.l.b16 %v174
    %v724 = vunpack.c.l.b16 %v175
    %v725 = vunpack.c.h.b16 %v175
    %v726 = vunpack.c.l.b16 %v176
    %v727 = vunpack.c.l.b16 %v177
    %v728 = vunpack.c.h.b16 %v177
    %v729 = vunpack.c.l.b16 %v178
    %v730 = vunpack.c.l.b16 %v179
    %v731 = vunpack.c.h.b16 %v179
    %v732 = vunpack.c.l.b16 %v180
    %v733 = vunpack.c.l.b16 %v181
    %v734 = vunpack.c.h.b16 %v181
    %v735 = vunpack.c.l.b16 %v182
    %v736 = vunpack.c.l.b16 %v183
    %v737 = vunpack.c.h.b16 %v183
    %v738 = vunpack.c.l.b16 %v184
    %v739 = vunpack.c.l.b16 %v185
    %v740 = vunpack.c.h.b16 %v185
    %v741 = vunpack.c.l.b16 %v186
    %v742 = vunpack.c.l.b16 %v187
    %v743 = vunpack.c.h.b16 %v187
    %v744 = vunpack.c.l.b16 %v188
    %v745 = vunpack.c.l.b16 %v189
    %v746 = vunpack.c.h.b16 %v189
    %v747 = vunpack.c.l.b16 %v190
    %v748 = vunpack.c.l.b16 %v191
    %v749 = vunpack.c.h.b16 %v191
    %v750 = vunpack.c.l.b16 %v192
    %v751 = vunpack.c.l.b16 %v193
    %v752 = vunpack.c.h.b16 %v193
    %v753 = vunpack.c.l.b16 %v194
    %v754 = vunpack.c.l.b16 %v195
    %v755 = vunpack.c.h.b16 %v195
    %v756 = vunpack.c.l.b16 %v196
    %v757 = vunpack.c.l.b16 %v197
    %v758 = vunpack.c.h.b16 %v197
    %v759 = vunpack.c.l.b16 %v198
    %v760 = vunpack.c.l.b16 %v199
    %v761 = vunpack.c.h.b16 %v199
    %v762 = vunpack.c.l.b16 %v200
    %v763 = vunpack.c.l.b16 %v201
    %v764 = vunpack.c.h.b16 %v201
    %v765 = vunpack.c.l.b16 %v202
    %v766 = vunpack.c.l.b16 %v203
    %v767 = vunpack.c.h.b16 %v203
    %v768 = vunpack.c.l.b16 %v204
    %v769 = vunpack.c.l.b16 %v205
    %v770 = vunpack.c.h.b16 %v205
    %v771 = vunpack.c.l.b16 %v206
    %v772 = vunpack.c.l.b16 %v207
    %v773 = vunpack.c.h.b16 %v207
    %v774 = vunpack.c.l.b16 %v208
    %v775 = vunpack.c.l.b16 %v209
    %v776 = vunpack.c.h.b16 %v209
    %v777 = vunpack.c.l.b16 %v210
    %v778 = vunpack.c.l.b16 %v211
    %v779 = vunpack.c.h.b16 %v211
    %v780 = vunpack.c.l.b16 %v212
    %v781 = vunpack.c.l.b16 %v213
    %v782 = vunpack.c.h.b16 %v213
    %v783 = vunpack.c.l.b16 %v214
    %v784 = vunpack.c.l.b16 %v215
    %v785 = vunpack.c.h.b16 %v215
    %v786 = vunpack.c.l.b16 %v216
    %v787 = vunpack.c.l.b16 %v217
    %v788 = vunpack.c.h.b16 %v217
    %v789 = vunpack.c.l.b16 %v218
    %v790 = vunpack.c.l.b16 %v219
    %v791 = vunpack.c.h.b16 %v219
    %v792 = vunpack.c.l.b16 %v220
    %v793 = vunpack.c.l.b16 %v221
    %v794 = vunpack.c.h.b16 %v221
    %v795 = vunpack.c.l.b16 %v222
    %v796 = vunpack.c.l.b16 %v223
    %v797 = vunpack.c.h.b16 %v223
    %v798 = vunpack.c.l.b16 %v224
    %v799 = vunpack.c.l.b16 %v225
    %v800 = vunpack.c.h.b16 %v225
    %v801 = vunpack.c.l.b16 %v226
    %v802 = vunpack.c.l.b16 %v227
    %v803 = vunpack.c.h.b16 %v227
    %v804 = vunpack.c.l.b16 %v228
    %v805 = vunpack.c.l.b16 %v229
    %v806 = vunpack.c.h.b16 %v229
    %v807 = vunpack.c.l.b16 %v230
    %v808 = vunpack.c.l.b16 %v231
    %v809 = vunpack.c.h.b16 %v231
    %v810 = vunpack.c.l.b16 %v232
    %v811 = vunpack.c.l.b16 %v233
    %v812 = vunpack.c.h.b16 %v233
    %v813 = vunpack.c.l.b16 %v234
    %v814 = vunpack.c.l.b16 %v235
    %v815 = vunpack.c.h.b16 %v235
    %v816 = vunpack.c.l.b16 %v236
    %v817 = vunpack.c.l.b16 %v237
    %v818 = vunpack.c.h.b16 %v237
    %v819 = vunpack.c.l.b16 %v238
    %v820 = vunpack.c.l.b16 %v239
    %v821 = vunpack.c.h.b16 %v239
    %v822 = vunpack.c.l.b16 %v240
    %v823 = vunpack.c.l.b16 %v241
    %v824 = vunpack.c.h.b16 %v241
    %v825 = vunpack.c.l.b16 %v242
    %v826 = vunpack.c.l.b16 %v243
    %v827 = vunpack.c.h.b16 %v243
    %v828 = vunpack.c.l.b16 %v244
    %v829 = vunpack.c.l.b16 %v245
    %v830 = vunpack.c.h.b16 %v245
    %v831 = vunpack.c.l.b16 %v246
    %v832 = vunpack.c.l.b16 %v247
    %v833 = vunpack.c.h.b16 %v247
    %v834 = vunpack.c.l.b16 %v248
    %v835 = vunpack.c.l.b16 %v249
    %v836 = vunpack.c.h.b16 %v249
    %v837 = vunpack.c.l.b16 %v250
    %v838 = vunpack.c.l.b16 %v251
    %v839 = vunpack.c.h.b16 %v251
    %v840 = vunpack.c.l.b16 %v252
    %v841 = vunpack.c.l.b16 %v253
    %v842 = vunpack.c.h.b16 %v253
    %v843 = vunpack.c.l.b16 %v254
    %v844 = vunpack.c.l.b16 %v255
    %v845 = vunpack.c.h.b16 %v255
    %v846 = vunpack.c.l.b16 %v256
    %v847 = vunpack.c.l.b16 %v257
    %v848 = vunpack.c.h.b16 %v257
    %v849 = vunpack.c.l.b16 %v258
    %v850 = vunpack.c.l.b16 %v259
    %v851 = vunpack.c.h.b16 %v259
    %v852 = vunpack.c.l.b16 %v260
    %v853 = vunpack.c.l.b16 %v261
    %v854 = vunpack.c.h.b16 %v261
    %v855 = vunpack.c.l.b16 %v262
    %v856 = vunpack.c.l.b16 %v263
    %v857 = vunpack.c.h.b16 %v263
    %v858 = vunpack.c.l.b16 %v264
    %v859 = vunpack.c.l.b16 %v265
    %v860 = vunpack.c.h.b16 %v265
    %v861 = vunpack.c.l.b16 %v266
    %v862 = vunpack.c.l.b16 %v267
    %v863 = vunpack.c.h.b16 %v267
    %v864 = vunpack.c.l.b16 %v268
    %v865 = vunpack.c.l.b16 %v269
    %v866 = vunpack.c.h.b16 %v269
    %v867 = vunpack.c.l.b16 %v270
    %v868 = vunpack.c.l.b16 %v271
    %v869 = vunpack.c.h.b16 %v271
    %v870 = vunpack.c.l.b16 %v272
    %v871 = vunpack.c.l.b16 %v273
    %v872 = vunpack.c.h.b16 %v273
    %v873 = vunpack.c.l.b16 %v274
    %v874 = vunpack.c.l.b16 %v275
    %v875 = vunpack.c.h.b16 %v275
    %v876 = vunpack.c.l.b16 %v276
    %v877 = vunpack.c.l.b16 %v277
    %v878 = vunpack.c.h.b16 %v277
    %v879 = vunpack.c.l.b16 %v278
    %v880 = vunpack.c.l.b16 %v279
    %v881 = vunpack.c.h.b16 %v279
    %v882 = vunpack.c.l.b16 %v280
    %v883 = vunpack.c.l.b16 %v281
    %v884 = vunpack.c.h.b16 %v281
    %v885 = vunpack.c.l.b16 %v282
    %v886 = vunpack.c.l.b16 %v283
    %v887 = vunpack.c.h.b16 %v283
    %v888 = vunpack.c.l.b16 %v284
    %v889 = vunpack.c.l.b16 %v285
    %v890 = vunpack.c.h.b16 %v285
    %v891 = vunpack.c.l.b16 %v286
    %v892 = vunpack.c.l.b16 %v287
    %v893 = vunpack.c.h.b16 %v287
    %v894 = vunpack.c.l.b16 %v288
    %v895 = vunpack.c.l.b16 %v289
    %v896 = vunpack.c.h.b16 %v289
    %v897 = vunpack.c.l.b16 %v290
    %v898 = vunpack.c.l.b16 %v291
    %v899 = vunpack.c.h.b16 %v291
    %v900 = vunpack.c.l.b16 %v292
    %v901 = vunpack.c.l.b16 %v293
    %v902 = vunpack.c.h.b16 %v293
    %v903 = vunpack.c.l.b16 %v294
    %v904 = vunpack.c.l.b16 %v295
    %v905 = vunpack.c.h.b16 %v295
    %v906 = vunpack.c.l.b16 %v296
    %v907 = vunpack.c.l.b16 %v297
    %v908 = vunpack.c.h.b16 %v297
    %v909 = vunpack.c.l.b16 %v298
    %v910 = vunpack.c.l.b16 %v299
    %v911 = vunpack.c.h.b16 %v299
    %v912 = vunpack.c.l.b16 %v300
    %v913 = vunpack.c.l.b16 %v301
    %v914 = vunpack.c.h.b16 %v301
    %v915 = vunpack.c.l.b16 %v302
    %v916 = vunpack.c.l.b16 %v303
    %v917 = vunpack.c.h.b16 %v303
    %v918 = vunpack.c.l.b16 %v304
    %v919 = vunpack.c.l.b16 %v305
    %v920 = vunpack.c.h.b16 %v305
    %v921 = vunpack.c.l.b16 %v306
    %v922 = vunpack.c.l.b16 %v307
    %v923 = vunpack.c.h.b16 %v307
    %v924 = vunpack.c.l.b16 %v308
    %v925 = vunpack.c.l.b16 %v309
    %v926 = vunpack.c.h.b16 %v309
    %v927 = vunpack.c.l.b16 %v310
    %v928 = vunpack.c.l.b16 %v311
    %v929 = vunpack.c.h.b16 %v311
    %v930 = vunpack.c.l.b16 %v312
    %v931 = vunpack.c.l.b16 %v313
    %v932 = vunpack.c.h.b16 %v313
    %v933 = vunpack.c.l.b16 %v314
    %v934 = vunpack.c.l.b16 %v315
    %v935 = vunpack.c.h.b16 %v315
    %v936 = vunpack.c.l.b16 %v316
    %v937 = vunpack.c.l.b16 %v317
    %v938 = vunpack.c.h.b16 %v317
    %v939 = vunpack.c.l.b16 %v318
    %v940 = vunpack.c.l.b16 %v319
    %v941 = vunpack.c.h.b16 %v319
    %v942 = vunpack.c.l.b16 %v320
    %v943 = vunpack.c.l.b16 %v321
    %v944 = vunpack.c.h.b16 %v321
    %v945 = vunpack.c.l.b16 %v322
    %v946 = vunpack.c.l.b16 %v323
    %v947 = vunpack.c.h.b16 %v323
    %v948 = vunpack.c.l.b16 %v324
    %v949 = vunpack.c.l.b16 %v325
    %v950 = vunpack.c.h.b16 %v325
    %v951 = vunpack.c.l.b16 %v326
    %v952 = vunpack.c.l.b16 %v327
    %v953 = vunpack.c.h.b16 %v327
    %v954 = vunpack.c.l.b16 %v328
    %v955 = vunpack.c.l.b16 %v329
    %v956 = vunpack.c.h.b16 %v329
    %v957 = vunpack.c.l.b16 %v330
    %v958 = vunpack.c.l.b16 %v331
    %v959 = vunpack.c.h.b16 %v331
    %v960 = vunpack.c.l.b16 %v332
    %v961 = vunpack.c.l.b16 %v333
    %v962 = vunpack.c.h.b16 %v333
    %v963 = vunpack.c.l.b16 %v334
    %v964 = vunpack.c.l.b16 %v335
    %v965 = vunpack.c.h.b16 %v335
    %v966 = vunpack.c.l.b16 %v336
    %v967 = vunpack.c.l.b16 %v337
    %v968 = vunpack.c.h.b16 %v337
    %v969 = vunpack.c.l.b16 %v338
    %v970 = vunpack.c.l.b16 %v339
    %v971 = vunpack.c.h.b16 %v339
    %v972 = vunpack.c.l.b16 %v340
    %v973 = vunpack.c.l.b16 %v341
    %v974 = vunpack.c.h.b16 %v341
    %v975 = vunpack.c.l.b16 %v342
    %v976 = vunpack.c.l.b16 %v343
    %v977 = vunpack.c.h.b16 %v343
    %v978 = vunpack.c.l.b16 %v344
    %v979 = vunpack.c.l.b16 %v345
    %v980 = vunpack.c.h.b16 %v345
    %v981 = vunpack.c.l.b16 %v346
    %v982 = vunpack.c.l.b16 %v347
    %v983 = vunpack.c.h.b16 %v347
    %v984 = vunpack.c.l.b16 %v348
    %v985 = vunpack.c.l.b16 %v349
    %v986 = vunpack.c.h.b16 %v349
    %v987 = vunpack.c.l.b16 %v350
    %v988 = vunpack.c.l.b16 %v351
    %v989 = vunpack.c.h.b16 %v351
    %v990 = vunpack.c.l.b16 %v352
    %v991 = vunpack.c.l.b16 %v353
    %v992 = vunpack.c.h.b16 %v353
    %v993 = vunpack.c.l.b16 %v354
    %v994 = vunpack.c.l.b16 %v355
    %v995 = vunpack.c.h.b16 %v355
    %v996 = vunpack.c.l.b16 %v356
    %v997 = vunpack.c.l.b16 %v357
    %v998 = vunpack.c.h.b16 %v357
    %v999 = vunpack.c.l.b16 %v358
    %v1000 = vunpack.c.l.b16 %v359
    %v1001 = vunpack.c.h.b16 %v359
    %v1002 = vunpack.c.l.b16 %v360
    %v1003 = vunpack.c.l.b16 %v361
    %v1004 = vunpack.c.h.b16 %v361
    %v1005 = vunpack.c.l.b16 %v362
    %v1006 = vunpack.c.l.b16 %v363
    %v1007 = vunpack.c.h.b16 %v363
    %v1008 = vunpack.c.l.b16 %v364
    %v1009 = vunpack.c.l.b16 %v365
    %v1010 = vunpack.c.h.b16 %v365
    %v1011 = vunpack.c.l.b16 %v366
    %v1012 = vunpack.c.l.b16 %v367
    %v1013 = vunpack.c.h.b16 %v367
    %v1014 = vunpack.c.l.b16 %v368
    %v1015 = vunpack.c.l.b16 %v369
    %v1016 = vunpack.c.h.b16 %v369
    %v1017 = vunpack.c.l.b16 %v370
    %v1018 = vunpack.c.l.b16 %v371
    %v1019 = vunpack.c.h.b16 %v371
    %v1020 = vunpack.c.l.b16 %v372
    %v1021 = vpack.c.b16 %v640, %v637
    %v1022 = vpack.c.b16 %v641, %v638
    %v1023 = vpack.c.b16 %v642, %v639
    %v1024 = vpack.c.b16 %v646, %v643
    %v1025 = vpack.c.b16 %v647, %v644
    %v1026 = vpack.c.b16 %v648, %v645
    %v1027 = vpack.c.b16 %v652, %v649
    %v1028 = vpack.c.b16 %v653, %v650
    %v1029 = vpack.c.b16 %v654, %v651
    %v1030 = vpack.c.b16 %v658, %v655
    %v1031 = vpack.c.b16 %v659, %v656
    %v1032 = vpack.c.b16 %v660, %v657
    %v1033 = vpack.c.b16 %v664, %v661
    %v1034 = vpack.c.b16 %v665, %v662
    %v1035 = vpack.c.b16 %v666, %v663
    %v1036 = vpack.c.b16 %v670, %v667
    %v1037 = vpack.c.b16 %v671, %v668
    %v1038 = vpack.c.b16 %v672, %v669
    %v1039 = vpack.c.b16 %v676, %v673
    %v1040 = vpack.c.b16 %v677, %v674
    %v1041 = vpack.c.b16 %v678, %v675
    %v1042 = vpack.c.b16 %v682, %v679
    %v1043 = vpack.c.b16 %v683, %v680
    %v1044 = vpack.c.b16 %v684, %v681
    %v1045 = vpack.c.b16 %v688, %v685
    %v1046 = vpack.c.b16 %v689, %v686
    %v1047 = vpack.c.b16 %v690, %v687
    %v1048 = vpack.c.b16 %v694, %v691
    %v1049 = vpack.c.b16 %v695, %v692
    %v1050 = vpack.c.b16 %v696, %v693
    %v1051 = vpack.c.b16 %v700, %v697
    %v1052 = vpack.c.b16 %v701, %v698
    %v1053 = vpack.c.b16 %v702, %v699
    %v1054 = vpack.c.b16 %v706, %v703
    %v1055 = vpack.c.b16 %v707, %v704
    %v1056 = vpack.c.b16 %v708, %v705
    %v1057 = vpack.c.b16 %v712, %v709
    %v1058 = vpack.c.b16 %v713, %v710
    %v1059 = vpack.c.b16 %v714, %v711
    %v1060 = vpack.c.b16 %v718, %v715
    %v1061 = vpack.c.b16 %v719, %v716
    %v1062 = vpack.c.b16 %v720, %v717
    %v1063 = vpack.c.b16 %v724, %v721
    %v1064 = vpack.c.b16 %v725, %v722
    %v1065 = vpack.c.b16 %v726, %v723
    %v1066 = vpack.c.b16 %v730, %v727
    %v1067 = vpack.c.b16 %v731, %v728
    %v1068 = vpack.c.b16 %v732, %v729
    %v1069 = vpack.c.b16 %v736, %v733
    %v1070 = vpack.c.b16 %v737, %v734
    %v1071 = vpack.c.b16 %v738, %v735
    %v1072 = vpack.c.b16 %v742, %v739
    %v1073 = vpack.c.b16 %v743, %v740
    %v1074 = vpack.c.b16 %v744, %v741
    %v1075 = vpack.c.b16 %v748, %v745
    %v1076 = vpack.c.b16 %v749, %v746
    %v1077 = vpack.c.b16 %v750, %v747
    %v1078 = vpack.c.b16 %v754, %v751
    %v1079 = vpack.c.b16 %v755, %v752
    %v1080 = vpack.c.b16 %v756, %v753
    %v1081 = vpack.c.b16 %v760, %v757
    %v1082 = vpack.c.b16 %v761, %v758
    %v1083 = vpack.c.b16 %v762, %v759
    %v1084 = vpack.c.b16 %v766, %v763
    %v1085 = vpack.c.b16 %v767, %v764
    %v1086 = vpack.c.b16 %v768, %v765
    %v1087 = vpack.c.b16 %v772, %v769
    %v1088 = vpack.c.b16 %v773, %v770
    %v1089 = vpack.c.b16 %v774, %v771
    %v1090 = vpack.c.b16 %v778, %v775
    %v1091 = vpack.c.b16 %v779, %v776
    %v1092 = vpack.c.b16 %v780, %v777
    %v1093 = vpack.c.b16 %v784, %v781
    %v1094 = vpack.c.b16 %v785, %v782
    %v1095 = vpack.c.b16 %v786, %v783
    %v1096 = vpack.c.b16 %v790, %v787
    %v1097 = vpack.c.b16 %v791, %v788
    %v1098 = vpack.c.b16 %v792, %v789
    %v1099 = vpack.c.b16 %v796, %v793
    %v1100 = vpack.c.b16 %v797, %v794
    %v1101 = vpack.c.b16 %v798, %v795
    %v1102 = vpack.c.b16 %v802, %v799
    %v1103 = vpack.c.b16 %v803, %v800
    %v1104 = vpack.c.b16 %v804, %v801
    %v1105 = vpack.c.b16 %v808, %v805
    %v1106 = vpack.c.b16 %v809, %v806
    %v1107 = vpack.c.b16 %v810, %v807
    %v1108 = vpack.c.b16 %v814, %v811
    %v1109 = vpack.c.b16 %v815, %v812
    %v1110 = vpack.c.b16 %v816, %v813
    %v1111 = vpack.c.b16 %v820, %v817
    %v1112 = vpack.c.b16 %v821, %v818
    %v1113 = vpack.c.b16 %v822, %v819
    %v1114 = vpack.c.b16 %v826, %v823
    %v1115 = vpack.c.b16 %v827, %v824
    %v1116 = vpack.c.b16 %v828, %v825
    %v1117 = vpack.c.b16 %v832, %v829
    %v1118 = vpack.c.b16 %v833, %v830
    %v1119 = vpack.c.b16 %v834, %v831
    %v1120 = vpack.c.b16 %v838, %v835
    %v1121 = vpack.c.b16 %v839, %v836
    %v1122 = vpack.c.b16 %v840, %v837
    %v1123 = vpack.c.b16 %v844, %v841
    %v1124 = vpack.c.b16 %v845, %v842
    %v1125 = vpack.c.b16 %v846, %v843
    %v1126 = vpack.c.b16 %v850, %v847
    %v1127 = vpack.c.b16 %v851, %v848
    %v1128 = vpack.c.b16 %v852, %v849
    %v1129 = vpack.c.b16 %v856, %v853
    %v1130 = vpack.c.b16 %v857, %v854
    %v1131 = vpack.c.b16 %v858, %v855
    %v1132 = vpack.c.b16 %v862, %v859
    %v1133 = vpack.c.b16 %v863, %v860
    %v1134 = vpack.c.b16 %v864, %v861
    %v1135 = vpack.c.b16 %v868, %v865
    %v1136 = vpack.c.b16 %v869, %v866
    %v1137 = vpack.c.b16 %v870, %v867
    %v1138 = vpack.c.b16 %v874, %v871
    %v1139 = vpack.c.b16 %v875, %v872
    %v1140 = vpack.c.b16 %v876, %v873
    %v1141 = vpack.c.b16 %v880, %v877
    %v1142 = vpack.c.b16 %v881, %v878
    %v1143 = vpack.c.b16 %v882, %v879
    %v1144 = vpack.c.b16 %v886, %v883
    %v1145 = vpack.c.b16 %v887, %v884
    %v1146 = vpack.c.b16 %v888, %v885
    %v1147 = vpack.c.b16 %v892, %v889
    %v1148 = vpack.c.b16 %v893, %v890
    %v1149 = vpack.c.b16 %v894, %v891
    %v1150 = vpack.c.b16 %v898, %v895
    %v1151 = vpack.c.b16 %v899, %v896
    %v1152 = vpack.c.b16 %v900, %v897
    %v1153 = vpack.c.b16 %v904, %v901
    %v1154 = vpack.c.b16 %v905, %v902
    %v1155 = vpack.c.b16 %v906, %v903
    %v1156 = vpack.c.b16 %v910, %v907
    %v1157 = vpack.c.b16 %v911, %v908
    %v1158 = vpack.c.b16 %v912, %v909
    %v1159 = vpack.c.b16 %v916, %v913
    %v1160 = vpack.c.b16 %v917, %v914
    %v1161 = vpack.c.b16 %v918, %v915
    %v1162 = vpack.c.b16 %v922, %v919
    %v1163 = vpack.c.b16 %v923, %v920
    %v1164 = vpack.c.b16 %v924, %v921
    %v1165 = vpack.c.b16 %v928, %v925
    %v1166 = vpack.c.b16 %v929, %v926
    %v1167 = vpack.c.b16 %v930, %v927
    %v1168 = vpack.c.b16 %v934, %v931
    %v1169 = vpack.c.b16 %v935, %v932
    %v1170 = vpack.c.b16 %v936, %v933
    %v1171 = vpack.c.b16 %v940, %v937
    %v1172 = vpack.c.b16 %v941, %v938
    %v1173 = vpack.c.b16 %v942, %v939
    %v1174 = vpack.c.b16 %v946, %v943
    %v1175 = vpack.c.b16 %v947, %v944
    %v1176 = vpack.c.b16 %v948, %v945
    %v1177 = vpack.c.b16 %v952, %v949
    %v1178 = vpack.c.b16 %v953, %v950
    %v1179 = vpack.c.b16 %v954, %v951
    %v1180 = vpack.c.b16 %v958, %v955
    %v1181 = vpack.c.b16 %v959, %v956
    %v1182 = vpack.c.b16 %v960, %v957
    %v1183 = vpack.c.b16 %v964, %v961
    %v1184 = vpack.c.b16 %v965, %v962
    %v1185 = vpack.c.b16 %v966, %v963
    %v1186 = vpack.c.b16 %v970, %v967
    %v1187 = vpack.c.b16 %v971, %v968
    %v1188 = vpack.c.b16 %v972, %v969
    %v1189 = vpack.c.b16 %v976, %v973
    %v1190 = vpack.c.b16 %v977, %v974
    %v1191 = vpack.c.b16 %v978, %v975
    %v1192 = vpack.c.b16 %v982, %v979
    %v1193 = vpack.c.b16 %v983, %v980
    %v1194 = vpack.c.b16 %v984, %v981
    %v1195 = vpack.c.b16 %v988, %v985
    %v1196 = vpack.c.b16 %v989, %v986
    %v1197 = vpack.c.b16 %v990, %v987
    %v1198 = vpack.c.b16 %v994, %v991
    %v1199 = vpack.c.b16 %v995, %v992
    %v1200 = vpack.c.b16 %v996, %v993
    %v1201 = vpack.c.b16 %v1000, %v997
    %v1202 = vpack.c.b16 %v1001, %v998
    %v1203 = vpack.c.b16 %v1002, %v999
    %v1204 = vpack.c.b16 %v1006, %v1003
    %v1205 = vpack.c.b16 %v1007, %v1004
    %v1206 = vpack.c.b16 %v1008, %v1005
    %v1207 = vpack.c.b16 %v1012, %v1009
    %v1208 = vpack.c.b16 %v1013, %v1010
    %v1209 = vpack.c.b16 %v1014, %v1011
    %v1210 = vpack.c.b16 %v1018, %v1015
    %v1211 = vpack.c.b16 %v1019, %v1016
    %v1212 = vpack.c.b16 %v1020, %v1017
    %1405 = vmatpush.bf16.msra.mxu0 %v1042
    %1406 = vmatpush.bf16.msra.mxu0 %v1039
    %1407 = vmatpush.bf16.msra.mxu0 %v1036
    %1408 = vmatpush.bf16.msra.mxu0 %v1033
    %1409 = vmatpush.bf16.msra.mxu0 %v1030
    %1410 = vmatpush.bf16.msra.mxu0 %v1027
    %1411 = vmatpush.bf16.msra.mxu0 %v1024
    %1412 = vmatpush.bf16.msra.mxu0 %v1021
    %1413 = vmatmul.bf16.gmra.mxu0 %v109
    %v1414 = vpop.f32.mrf.mxu0
    %v1415 = vadd.f32 %v375, %v1414
    %v1416 = vpop.f32.mrf.mxu0
    %1417 = vdwg.mxu0
    %1418 = vmatpush.bf16.msra.mxu0 %v1066
    %1419 = vmatpush.bf16.msra.mxu0 %v1063
    %1420 = vmatpush.bf16.msra.mxu0 %v1060
    %1421 = vmatpush.bf16.msra.mxu0 %v1057
    %1422 = vmatpush.bf16.msra.mxu0 %v1054
    %1423 = vmatpush.bf16.msra.mxu0 %v1051
    %1424 = vmatpush.bf16.msra.mxu0 %v1048
    %1425 = vmatpush.bf16.msra.mxu0 %v1045
    %1426 = vmatmul.bf16.gmra.mxu0 %v110
    %v1427 = vpop.f32.mrf.mxu0
    %v1428 = vadd.f32 %v1415, %v1427
    %v1429 = vpop.f32.mrf.mxu0
    %1430 = vdwg.mxu0
    %1431 = vmatpush.bf16.msra.mxu0 %v1090
    %1432 = vmatpush.bf16.msra.mxu0 %v1087
    %1433 = vmatpush.bf16.msra.mxu0 %v1084
    %1434 = vmatpush.bf16.msra.mxu0 %v1081
    %1435 = vmatpush.bf16.msra.mxu0 %v1078
    %1436 = vmatpush.bf16.msra.mxu0 %v1075
    %1437 = vmatpush.bf16.msra.mxu0 %v1072
    %1438 = vmatpush.bf16.msra.mxu0 %v1069
    %1439 = vmatmul.bf16.gmra.mxu0 %v111
    %v1440 = vpop.f32.mrf.mxu0
    %v1441 = vadd.f32 %v1428, %v1440
    %v1442 = vpop.f32.mrf.mxu0
    %1443 = vdwg.mxu0
    %1444 = vmatpush.bf16.msra.mxu0 %v1114
    %1445 = vmatpush.bf16.msra.mxu0 %v1111
    %1446 = vmatpush.bf16.msra.mxu0 %v1108
    %1447 = vmatpush.bf16.msra.mxu0 %v1105
    %1448 = vmatpush.bf16.msra.mxu0 %v1102
    %1449 = vmatpush.bf16.msra.mxu0 %v1099
    %1450 = vmatpush.bf16.msra.mxu0 %v1096
    %1451 = vmatpush.bf16.msra.mxu0 %v1093
    %1452 = vmatmul.bf16.gmra.mxu0 %v112
    %v1453 = vpop.f32.mrf.mxu0
    %v1454 = vadd.f32 %v1441, %v1453
    %v1455 = vpop.f32.mrf.mxu0
    %1456 = vdwg.mxu0
    %1457 = vmatpush.bf16.msra.mxu0 %v1138
    %1458 = vmatpush.bf16.msra.mxu0 %v1135
    %1459 = vmatpush.bf16.msra.mxu0 %v1132
    %1460 = vmatpush.bf16.msra.mxu0 %v1129
    %1461 = vmatpush.bf16.msra.mxu0 %v1126
    %1462 = vmatpush.bf16.msra.mxu0 %v1123
    %1463 = vmatpush.bf16.msra.mxu0 %v1120
    %1464 = vmatpush.bf16.msra.mxu0 %v1117
    %1465 = vmatmul.bf16.gmra.mxu0 %v113
    %v1466 = vpop.f32.mrf.mxu0
    %v1467 = vadd.f32 %v1454, %v1466
    %v1468 = vpop.f32.mrf.mxu0
    %1469 = vdwg.mxu0
    %1470 = vmatpush.bf16.msra.mxu0 %v1162
    %1471 = vmatpush.bf16.msra.mxu0 %v1159
    %1472 = vmatpush.bf16.msra.mxu0 %v1156
    %1473 = vmatpush.bf16.msra.mxu0 %v1153
    %1474 = vmatpush.bf16.msra.mxu0 %v1150
    %1475 = vmatpush.bf16.msra.mxu0 %v1147
    %1476 = vmatpush.bf16.msra.mxu0 %v1144
    %1477 = vmatpush.bf16.msra.mxu0 %v1141
    %1478 = vmatmul.bf16.gmra.mxu0 %v114
    %v1479 = vpop.f32.mrf.mxu0
    %v1480 = vadd.f32 %v1467, %v1479
    %v1481 = vpop.f32.mrf.mxu0
    %1482 = vdwg.mxu0
    %1483 = vmatpush.bf16.msra.mxu0 %v1186
    %1484 = vmatpush.bf16.msra.mxu0 %v1183
    %1485 = vmatpush.bf16.msra.mxu0 %v1180
    %1486 = vmatpush.bf16.msra.mxu0 %v1177
    %1487 = vmatpush.bf16.msra.mxu0 %v1174
    %1488 = vmatpush.bf16.msra.mxu0 %v1171
    %1489 = vmatpush.bf16.msra.mxu0 %v1168
    %1490 = vmatpush.bf16.msra.mxu0 %v1165
    %1491 = vmatmul.bf16.gmra.mxu0 %v115
    %v1492 = vpop.f32.mrf.mxu0
    %v1493 = vadd.f32 %v1480, %v1492
    %v1494 = vpop.f32.mrf.mxu0
    %1495 = vdwg.mxu0
    %1496 = vmatpush.bf16.msra.mxu0 %v1210
    %1497 = vmatpush.bf16.msra.mxu0 %v1207
    %1498 = vmatpush.bf16.msra.mxu0 %v1204
    %1499 = vmatpush.bf16.msra.mxu0 %v1201
    %1500 = vmatpush.bf16.msra.mxu0 %v1198
    %1501 = vmatpush.bf16.msra.mxu0 %v1195
    %1502 = vmatpush.bf16.msra.mxu0 %v1192
    %1503 = vmatpush.bf16.msra.mxu0 %v1189
    %1504 = vmatmul.bf16.gmra.mxu0 %v116
    %v1505 = vpop.f32.mrf.mxu0
    %v1506 = vadd.f32 %v1493, %v1505
    %v1507 = vpop.f32.mrf.mxu0
    %1508 = vdwg.mxu0
    %1509 = vmatpush.bf16.msra.mxu0 %v1043
    %1510 = vmatpush.bf16.msra.mxu0 %v1040
    %1511 = vmatpush.bf16.msra.mxu0 %v1037
    %1512 = vmatpush.bf16.msra.mxu0 %v1034
    %1513 = vmatpush.bf16.msra.mxu0 %v1031
    %1514 = vmatpush.bf16.msra.mxu0 %v1028
    %1515 = vmatpush.bf16.msra.mxu0 %v1025
    %1516 = vmatpush.bf16.msra.mxu0 %v1022
    %1517 = vmatmul.bf16.gmra.mxu0 %v109
    %v1518 = vpop.f32.mrf.mxu0
    %v1519 = vadd.f32 %v376, %v1518
    %v1520 = vpop.f32.mrf.mxu0
    %1521 = vdwg.mxu0
    %1522 = vmatpush.bf16.msra.mxu0 %v1067
    %1523 = vmatpush.bf16.msra.mxu0 %v1064
    %1524 = vmatpush.bf16.msra.mxu0 %v1061
    %1525 = vmatpush.bf16.msra.mxu0 %v1058
    %1526 = vmatpush.bf16.msra.mxu0 %v1055
    %1527 = vmatpush.bf16.msra.mxu0 %v1052
    %1528 = vmatpush.bf16.msra.mxu0 %v1049
    %1529 = vmatpush.bf16.msra.mxu0 %v1046
    %1530 = vmatmul.bf16.gmra.mxu0 %v110
    %v1531 = vpop.f32.mrf.mxu0
    %v1532 = vadd.f32 %v1519, %v1531
    %v1533 = vpop.f32.mrf.mxu0
    %1534 = vdwg.mxu0
    %1535 = vmatpush.bf16.msra.mxu0 %v1091
    %1536 = vmatpush.bf16.msra.mxu0 %v1088
    %1537 = vmatpush.bf16.msra.mxu0 %v1085
    %1538 = vmatpush.bf16.msra.mxu0 %v1082
    %1539 = vmatpush.bf16.msra.mxu0 %v1079
    %1540 = vmatpush.bf16.msra.mxu0 %v1076
    %1541 = vmatpush.bf16.msra.mxu0 %v1073
    %1542 = vmatpush.bf16.msra.mxu0 %v1070
    %1543 = vmatmul.bf16.gmra.mxu0 %v111
    %v1544 = vpop.f32.mrf.mxu0
    %v1545 = vadd.f32 %v1532, %v1544
    %v1546 = vpop.f32.mrf.mxu0
    %1547 = vdwg.mxu0
    %1548 = vmatpush.bf16.msra.mxu0 %v1115
    %1549 = vmatpush.bf16.msra.mxu0 %v1112
    %1550 = vmatpush.bf16.msra.mxu0 %v1109
    %1551 = vmatpush.bf16.msra.mxu0 %v1106
    %1552 = vmatpush.bf16.msra.mxu0 %v1103
    %1553 = vmatpush.bf16.msra.mxu0 %v1100
    %1554 = vmatpush.bf16.msra.mxu0 %v1097
    %1555 = vmatpush.bf16.msra.mxu0 %v1094
    %1556 = vmatmul.bf16.gmra.mxu0 %v112
    %v1557 = vpop.f32.mrf.mxu0
    %v1558 = vadd.f32 %v1545, %v1557
    %v1559 = vpop.f32.mrf.mxu0
    %1560 = vdwg.mxu0
    %1561 = vmatpush.bf16.msra.mxu0 %v1139
    %1562 = vmatpush.bf16.msra.mxu0 %v1136
    %1563 = vmatpush.bf16.msra.mxu0 %v1133
    %1564 = vmatpush.bf16.msra.mxu0 %v1130
    %1565 = vmatpush.bf16.msra.mxu0 %v1127
    %1566 = vmatpush.bf16.msra.mxu0 %v1124
    %1567 = vmatpush.bf16.msra.mxu0 %v1121
    %1568 = vmatpush.bf16.msra.mxu0 %v1118
    %1569 = vmatmul.bf16.gmra.mxu0 %v113
    %v1570 = vpop.f32.mrf.mxu0
    %v1571 = vadd.f32 %v1558, %v1570
    %v1572 = vpop.f32.mrf.mxu0
    %1573 = vdwg.mxu0
    %1574 = vmatpush.bf16.msra.mxu0 %v1163
    %1575 = vmatpush.bf16.msra.mxu0 %v1160
    %1576 = vmatpush.bf16.msra.mxu0 %v1157
    %1577 = vmatpush.bf16.msra.mxu0 %v1154
    %1578 = vmatpush.bf16.msra.mxu0 %v1151
    %1579 = vmatpush.bf16.msra.mxu0 %v1148
    %1580 = vmatpush.bf16.msra.mxu0 %v1145
    %1581 = vmatpush.bf16.msra.mxu0 %v1142
    %1582 = vmatmul.bf16.gmra.mxu0 %v114
    %v1583 = vpop.f32.mrf.mxu0
    %v1584 = vadd.f32 %v1571, %v1583
    %v1585 = vpop.f32.mrf.mxu0
    %1586 = vdwg.mxu0
    %1587 = vmatpush.bf16.msra.mxu0 %v1187
    %1588 = vmatpush.bf16.msra.mxu0 %v1184
    %1589 = vmatpush.bf16.msra.mxu0 %v1181
    %1590 = vmatpush.bf16.msra.mxu0 %v1178
    %1591 = vmatpush.bf16.msra.mxu0 %v1175
    %1592 = vmatpush.bf16.msra.mxu0 %v1172
    %1593 = vmatpush.bf16.msra.mxu0 %v1169
    %1594 = vmatpush.bf16.msra.mxu0 %v1166
    %1595 = vmatmul.bf16.gmra.mxu0 %v115
    %v1596 = vpop.f32.mrf.mxu0
    %v1597 = vadd.f32 %v1584, %v1596
    %v1598 = vpop.f32.mrf.mxu0
    %1599 = vdwg.mxu0
    %1600 = vmatpush.bf16.msra.mxu0 %v1211
    %1601 = vmatpush.bf16.msra.mxu0 %v1208
    %1602 = vmatpush.bf16.msra.mxu0 %v1205
    %1603 = vmatpush.bf16.msra.mxu0 %v1202
    %1604 = vmatpush.bf16.msra.mxu0 %v1199
    %1605 = vmatpush.bf16.msra.mxu0 %v1196
    %1606 = vmatpush.bf16.msra.mxu0 %v1193
    %1607 = vmatpush.bf16.msra.mxu0 %v1190
    %1608 = vmatmul.bf16.gmra.mxu0 %v116
    %v1609 = vpop.f32.mrf.mxu0
    %v1610 = vadd.f32 %v1597, %v1609
    %v1611 = vpop.f32.mrf.mxu0
    %1612 = vdwg.mxu0
    %1613 = vmatpush.bf16.msra.mxu0 %v1044
    %1614 = vmatpush.bf16.msra.mxu0 %v1041
    %1615 = vmatpush.bf16.msra.mxu0 %v1038
    %1616 = vmatpush.bf16.msra.mxu0 %v1035
    %1617 = vmatpush.bf16.msra.mxu0 %v1032
    %1618 = vmatpush.bf16.msra.mxu0 %v1029
    %1619 = vmatpush.bf16.msra.mxu0 %v1026
    %1620 = vmatpush.bf16.msra.mxu0 %v1023
    %1621 = vmatmul.bf16.gmra.mxu0 %v109
    %v1622 = vpop.f32.mrf.mxu0
    %v1623 = vadd.f32 %v377, %v1622
    %v1624 = vpop.f32.mrf.mxu0
    %1625 = vdwg.mxu0
    %1626 = vmatpush.bf16.msra.mxu0 %v1068
    %1627 = vmatpush.bf16.msra.mxu0 %v1065
    %1628 = vmatpush.bf16.msra.mxu0 %v1062
    %1629 = vmatpush.bf16.msra.mxu0 %v1059
    %1630 = vmatpush.bf16.msra.mxu0 %v1056
    %1631 = vmatpush.bf16.msra.mxu0 %v1053
    %1632 = vmatpush.bf16.msra.mxu0 %v1050
    %1633 = vmatpush.bf16.msra.mxu0 %v1047
    %1634 = vmatmul.bf16.gmra.mxu0 %v110
    %v1635 = vpop.f32.mrf.mxu0
    %v1636 = vadd.f32 %v1623, %v1635
    %v1637 = vpop.f32.mrf.mxu0
    %1638 = vdwg.mxu0
    %1639 = vmatpush.bf16.msra.mxu0 %v1092
    %1640 = vmatpush.bf16.msra.mxu0 %v1089
    %1641 = vmatpush.bf16.msra.mxu0 %v1086
    %1642 = vmatpush.bf16.msra.mxu0 %v1083
    %1643 = vmatpush.bf16.msra.mxu0 %v1080
    %1644 = vmatpush.bf16.msra.mxu0 %v1077
    %1645 = vmatpush.bf16.msra.mxu0 %v1074
    %1646 = vmatpush.bf16.msra.mxu0 %v1071
    %1647 = vmatmul.bf16.gmra.mxu0 %v111
    %v1648 = vpop.f32.mrf.mxu0
    %v1649 = vadd.f32 %v1636, %v1648
    %v1650 = vpop.f32.mrf.mxu0
    %1651 = vdwg.mxu0
    %1652 = vmatpush.bf16.msra.mxu0 %v1116
    %1653 = vmatpush.bf16.msra.mxu0 %v1113
    %1654 = vmatpush.bf16.msra.mxu0 %v1110
    %1655 = vmatpush.bf16.msra.mxu0 %v1107
    %1656 = vmatpush.bf16.msra.mxu0 %v1104
    %1657 = vmatpush.bf16.msra.mxu0 %v1101
    %1658 = vmatpush.bf16.msra.mxu0 %v1098
    %1659 = vmatpush.bf16.msra.mxu0 %v1095
    %1660 = vmatmul.bf16.gmra.mxu0 %v112
    %v1661 = vpop.f32.mrf.mxu0
    %v1662 = vadd.f32 %v1649, %v1661
    %v1663 = vpop.f32.mrf.mxu0
    %1664 = vdwg.mxu0
    %1665 = vmatpush.bf16.msra.mxu0 %v1140
    %1666 = vmatpush.bf16.msra.mxu0 %v1137
    %1667 = vmatpush.bf16.msra.mxu0 %v1134
    %1668 = vmatpush.bf16.msra.mxu0 %v1131
    %1669 = vmatpush.bf16.msra.mxu0 %v1128
    %1670 = vmatpush.bf16.msra.mxu0 %v1125
    %1671 = vmatpush.bf16.msra.mxu0 %v1122
    %1672 = vmatpush.bf16.msra.mxu0 %v1119
    %1673 = vmatmul.bf16.gmra.mxu0 %v113
    %v1674 = vpop.f32.mrf.mxu0
    %v1675 = vadd.f32 %v1662, %v1674
    %v1676 = vpop.f32.mrf.mxu0
    %1677 = vdwg.mxu0
    %1678 = vmatpush.bf16.msra.mxu0 %v1164
    %1679 = vmatpush.bf16.msra.mxu0 %v1161
    %1680 = vmatpush.bf16.msra.mxu0 %v1158
    %1681 = vmatpush.bf16.msra.mxu0 %v1155
    %1682 = vmatpush.bf16.msra.mxu0 %v1152
    %1683 = vmatpush.bf16.msra.mxu0 %v1149
    %1684 = vmatpush.bf16.msra.mxu0 %v1146
    %1685 = vmatpush.bf16.msra.mxu0 %v1143
    %1686 = vmatmul.bf16.gmra.mxu0 %v114
    %v1687 = vpop.f32.mrf.mxu0
    %v1688 = vadd.f32 %v1675, %v1687
    %v1689 = vpop.f32.mrf.mxu0
    %1690 = vdwg.mxu0
    %1691 = vmatpush.bf16.msra.mxu0 %v1188
    %1692 = vmatpush.bf16.msra.mxu0 %v1185
    %1693 = vmatpush.bf16.msra.mxu0 %v1182
    %1694 = vmatpush.bf16.msra.mxu0 %v1179
    %1695 = vmatpush.bf16.msra.mxu0 %v1176
    %1696 = vmatpush.bf16.msra.mxu0 %v1173
    %1697 = vmatpush.bf16.msra.mxu0 %v1170
    %1698 = vmatpush.bf16.msra.mxu0 %v1167
    %1699 = vmatmul.bf16.gmra.mxu0 %v115
    %v1700 = vpop.f32.mrf.mxu0
    %v1701 = vadd.f32 %v1688, %v1700
    %v1702 = vpop.f32.mrf.mxu0
    %1703 = vdwg.mxu0
    %1704 = vmatpush.bf16.msra.mxu0 %v1212
    %1705 = vmatpush.bf16.msra.mxu0 %v1209
    %1706 = vmatpush.bf16.msra.mxu0 %v1206
    %1707 = vmatpush.bf16.msra.mxu0 %v1203
    %1708 = vmatpush.bf16.msra.mxu0 %v1200
    %1709 = vmatpush.bf16.msra.mxu0 %v1197
    %1710 = vmatpush.bf16.msra.mxu0 %v1194
    %1711 = vmatpush.bf16.msra.mxu0 %v1191
    %1712 = vmatmul.bf16.gmra.mxu0 %v116
    %v1713 = vpop.f32.mrf.mxu0
    %v1714 = vadd.f32 %v1701, %v1713
    %v1715 = vpop.f32.mrf.mxu0
    %1716 = vdwg.mxu0
    %v1717 = vmax.f32 %v1506, 0.0
    %v1718 = vmax.f32 %v1610, 0.0
    %v1719 = vmax.f32 %v1714, 0.0
    %v1720 = vpack.c.bf16 %v1717, %v1717
    %v1721 = vpack.c.bf16 %v1718, %v1718
    %v1722 = vpack.c.bf16 %v1719, %v1719
    %v1723 = vld [vmem:[#allocation8] sm:$0xf]
    %v1724 = vld [vmem:[#allocation8 + $0x4] sm:$0xf]
    %v1725 = vld [vmem:[#allocation8 + $0x8] sm:$0xf]
    %v1726 = vld [vmem:[#allocation8 + $0xc] sm:$0xf]
    %v1727 = vld [vmem:[#allocation8 + $0x10] sm:$0xf]
    %v1728 = vld [vmem:[#allocation8 + $0x14] sm:$0xf]
    %v1729 = vld [vmem:[#allocation8 + $0x18] sm:$0xf]
    %v1730 = vld [vmem:[#allocation8 + $0x1c] sm:$0xf]
    %v1731 = vld [vmem:[#allocation8 + $0x20] sm:$0xf]
    %v1732 = vld [vmem:[#allocation8 + $0x24] sm:$0xf]
    %v1733 = vld [vmem:[#allocation8 + $0x28] sm:$0xf]
    %v1734 = vld [vmem:[#allocation8 + $0x2c] sm:$0xf]
    %v1735 = vld [vmem:[#allocation8 + $0x30] sm:$0xf]
    %v1736 = vld [vmem:[#allocation8 + $0x34] sm:$0xf]
    %v1737 = vld [vmem:[#allocation8 + $0x38] sm:$0xf]
    %v1738 = vld [vmem:[#allocation8 + $0x3c] sm:$0xf]
    %v1739 = vld [vmem:[#allocation8 + $0x40] sm:$0xf]
    %v1740 = vld [vmem:[#allocation8 + $0x44] sm:$0xf]
    %v1741 = vld [vmem:[#allocation8 + $0x48] sm:$0xf]
    %v1742 = vld [vmem:[#allocation8 + $0x4c] sm:$0xf]
    %v1743 = vld [vmem:[#allocation8 + $0x50] sm:$0xf]
    %v1744 = vld [vmem:[#allocation8 + $0x54] sm:$0xf]
    %v1745 = vld [vmem:[#allocation8 + $0x58] sm:$0xf]
    %v1746 = vld [vmem:[#allocation8 + $0x5c] sm:$0xf]
    %v1747 = vld [vmem:[#allocation8 + $0x60] sm:$0xf]
    %v1748 = vld [vmem:[#allocation8 + $0x64] sm:$0xf]
    %v1749 = vld [vmem:[#allocation8 + $0x68] sm:$0xf]
    %v1750 = vld [vmem:[#allocation8 + $0x6c] sm:$0xf]
    %v1751 = vld [vmem:[#allocation8 + $0x70] sm:$0xf]
    %v1752 = vld [vmem:[#allocation8 + $0x74] sm:$0xf]
    %v1753 = vld [vmem:[#allocation8 + $0x78] sm:$0xf]
    %v1754 = vld [vmem:[#allocation8 + $0x7c] sm:$0xf]
    %v1755 = vld [vmem:[#allocation8 + $0x80] sm:$0xf]
    %v1756 = vld [vmem:[#allocation8 + $0x84] sm:$0xf]
    %v1757 = vld [vmem:[#allocation8 + $0x88] sm:$0xf]
    %v1758 = vld [vmem:[#allocation8 + $0x8c] sm:$0xf]
    %v1759 = vld [vmem:[#allocation8 + $0x90] sm:$0xf]
    %v1760 = vld [vmem:[#allocation8 + $0x94] sm:$0xf]
    %v1761 = vld [vmem:[#allocation8 + $0x98] sm:$0xf]
    %v1762 = vld [vmem:[#allocation8 + $0x9c] sm:$0xf]
    %v1763 = vld [vmem:[#allocation8 + $0xa0] sm:$0xf]
    %v1764 = vld [vmem:[#allocation8 + $0xa4] sm:$0xf]
    %v1765 = vld [vmem:[#allocation8 + $0xa8] sm:$0xf]
    %v1766 = vld [vmem:[#allocation8 + $0xac] sm:$0xf]
    %v1767 = vld [vmem:[#allocation8 + $0xb0] sm:$0xf]
    %v1768 = vld [vmem:[#allocation8 + $0xb4] sm:$0xf]
    %v1769 = vld [vmem:[#allocation8 + $0xb8] sm:$0xf]
    %v1770 = vld [vmem:[#allocation8 + $0xbc] sm:$0xf]
    %v1771 = vld [vmem:[%s4] sm:$0x1]
    %v1773 = vperm.slane %v1771, 0
    %v1823 = vunpack.c.l.b16 %v1723
    %v1824 = vunpack.c.l.b16 %v1724
    %v1825 = vunpack.c.l.b16 %v1725
    %v1826 = vunpack.c.l.b16 %v1726
    %v1827 = vunpack.c.l.b16 %v1727
    %v1828 = vunpack.c.l.b16 %v1728
    %v1829 = vunpack.c.l.b16 %v1729
    %v1830 = vunpack.c.l.b16 %v1730
    %v1831 = vunpack.c.l.b16 %v1731
    %v1832 = vunpack.c.l.b16 %v1732
    %v1833 = vunpack.c.l.b16 %v1733
    %v1834 = vunpack.c.l.b16 %v1734
    %v1835 = vunpack.c.l.b16 %v1735
    %v1836 = vunpack.c.l.b16 %v1736
    %v1837 = vunpack.c.l.b16 %v1737
    %v1838 = vunpack.c.l.b16 %v1738
    %v1839 = vunpack.c.l.b16 %v1739
    %v1840 = vunpack.c.l.b16 %v1740
    %v1841 = vunpack.c.l.b16 %v1741
    %v1842 = vunpack.c.l.b16 %v1742
    %v1843 = vunpack.c.l.b16 %v1743
    %v1844 = vunpack.c.l.b16 %v1744
    %v1845 = vunpack.c.l.b16 %v1745
    %v1846 = vunpack.c.l.b16 %v1746
    %v1847 = vunpack.c.l.b16 %v1747
    %v1848 = vunpack.c.l.b16 %v1748
    %v1849 = vunpack.c.l.b16 %v1749
    %v1850 = vunpack.c.l.b16 %v1750
    %v1851 = vunpack.c.l.b16 %v1751
    %v1852 = vunpack.c.l.b16 %v1752
    %v1853 = vunpack.c.l.b16 %v1753
    %v1854 = vunpack.c.l.b16 %v1754
    %v1855 = vunpack.c.l.b16 %v1755
    %v1856 = vunpack.c.l.b16 %v1756
    %v1857 = vunpack.c.l.b16 %v1757
    %v1858 = vunpack.c.l.b16 %v1758
    %v1859 = vunpack.c.l.b16 %v1759
    %v1860 = vunpack.c.l.b16 %v1760
    %v1861 = vunpack.c.l.b16 %v1761
    %v1862 = vunpack.c.l.b16 %v1762
    %v1863 = vunpack.c.l.b16 %v1763
    %v1864 = vunpack.c.l.b16 %v1764
    %v1865 = vunpack.c.l.b16 %v1765
    %v1866 = vunpack.c.l.b16 %v1766
    %v1867 = vunpack.c.l.b16 %v1767
    %v1868 = vunpack.c.l.b16 %v1768
    %v1869 = vunpack.c.l.b16 %v1769
    %v1870 = vunpack.c.l.b16 %v1770
    %v1871 = vpack.c.b16 %v1824, %v1823
    %v1872 = vpack.c.b16 %v1826, %v1825
    %v1873 = vpack.c.b16 %v1828, %v1827
    %v1874 = vpack.c.b16 %v1830, %v1829
    %v1875 = vpack.c.b16 %v1832, %v1831
    %v1876 = vpack.c.b16 %v1834, %v1833
    %v1877 = vpack.c.b16 %v1836, %v1835
    %v1878 = vpack.c.b16 %v1838, %v1837
    %v1879 = vpack.c.b16 %v1840, %v1839
    %v1880 = vpack.c.b16 %v1842, %v1841
    %v1881 = vpack.c.b16 %v1844, %v1843
    %v1882 = vpack.c.b16 %v1846, %v1845
    %v1883 = vpack.c.b16 %v1848, %v1847
    %v1884 = vpack.c.b16 %v1850, %v1849
    %v1885 = vpack.c.b16 %v1852, %v1851
    %v1886 = vpack.c.b16 %v1854, %v1853
    %v1887 = vpack.c.b16 %v1856, %v1855
    %v1888 = vpack.c.b16 %v1858, %v1857
    %v1889 = vpack.c.b16 %v1860, %v1859
    %v1890 = vpack.c.b16 %v1862, %v1861
    %v1891 = vpack.c.b16 %v1864, %v1863
    %v1892 = vpack.c.b16 %v1866, %v1865
    %v1893 = vpack.c.b16 %v1868, %v1867
    %v1894 = vpack.c.b16 %v1870, %v1869
    %1919 = vmatpush.bf16.msra.mxu0 %v1878
    %1920 = vmatpush.bf16.msra.mxu0 %v1877
    %1921 = vmatpush.bf16.msra.mxu0 %v1876
    %1922 = vmatpush.bf16.msra.mxu0 %v1875
    %1923 = vmatpush.bf16.msra.mxu0 %v1874
    %1924 = vmatpush.bf16.msra.mxu0 %v1873
    %1925 = vmatpush.bf16.msra.mxu0 %v1872
    %1926 = vmatpush.bf16.msra.mxu0 %v1871
    %1927 = vmatmul.bf16.gmra.mxu0 %v1720
    %v1928 = vpop.f32.mrf.mxu0
    %v1929 = vadd.f32 %v1773, %v1928
    %v1930 = vpop.f32.mrf.mxu0
    %1931 = vdwg.mxu0
    %1932 = vmatpush.bf16.msra.mxu0 %v1886
    %1933 = vmatpush.bf16.msra.mxu0 %v1885
    %1934 = vmatpush.bf16.msra.mxu0 %v1884
    %1935 = vmatpush.bf16.msra.mxu0 %v1883
    %1936 = vmatpush.bf16.msra.mxu0 %v1882
    %1937 = vmatpush.bf16.msra.mxu0 %v1881
    %1938 = vmatpush.bf16.msra.mxu0 %v1880
    %1939 = vmatpush.bf16.msra.mxu0 %v1879
    %1940 = vmatmul.bf16.gmra.mxu0 %v1721
    %v1941 = vpop.f32.mrf.mxu0
    %v1942 = vadd.f32 %v1929, %v1941
    %v1943 = vpop.f32.mrf.mxu0
    %1944 = vdwg.mxu0
    %1945 = vmatpush.bf16.msra.mxu0 %v1894
    %1946 = vmatpush.bf16.msra.mxu0 %v1893
    %1947 = vmatpush.bf16.msra.mxu0 %v1892
    %1948 = vmatpush.bf16.msra.mxu0 %v1891
    %1949 = vmatpush.bf16.msra.mxu0 %v1890
    %1950 = vmatpush.bf16.msra.mxu0 %v1889
    %1951 = vmatpush.bf16.msra.mxu0 %v1888
    %1952 = vmatpush.bf16.msra.mxu0 %v1887
    %1953 = vmatmul.bf16.gmra.mxu0 %v1722
    %v1954 = vpop.f32.mrf.mxu0
    %v1955 = vadd.f32 %v1942, %v1954
    %v1956 = vpop.f32.mrf.mxu0
    %1957 = vdwg.mxu0
    %v1958 = vmax.f32 %v1955, 0.0
    %v1959 = vpack.c.bf16 %v1958, %v1958
    %v1960 = vld [vmem:[#allocation10] sm:$0xf]
    %v1961 = vld [vmem:[#allocation10 + $0x4] sm:$0xf]
    %v1962 = vld [vmem:[#allocation10 + $0x8] sm:$0xf]
    %v1963 = vld [vmem:[#allocation10 + $0xc] sm:$0xf]
    %v1964 = vld [vmem:[#allocation10 + $0x10] sm:$0xf]
    %v1965 = vld [vmem:[#allocation10 + $0x14] sm:$0xf]
    %v1966 = vld [vmem:[#allocation10 + $0x18] sm:$0xf]
    %v1967 = vld [vmem:[#allocation10 + $0x1c] sm:$0xf]
    %v1968 = vld [vmem:[#allocation10 + $0x20] sm:$0xf]
    %v1969 = vld [vmem:[#allocation10 + $0x24] sm:$0xf]
    %v1970 = vld [vmem:[#allocation10 + $0x28] sm:$0xf]
    %v1971 = vld [vmem:[#allocation10 + $0x2c] sm:$0xf]
    %v1972 = vld [vmem:[#allocation10 + $0x30] sm:$0xf]
    %v1973 = vld [vmem:[#allocation10 + $0x34] sm:$0xf]
    %v1974 = vld [vmem:[#allocation10 + $0x38] sm:$0xf]
    %v1975 = vld [vmem:[#allocation10 + $0x3c] sm:$0xf]
    %v1976 = vld [vmem:[%s6] sm:$0x1]
    %v1978 = vperm.slane %v1976, 0
    %v1996 = vunpack.c.l.b16 %v1960
    %v1997 = vunpack.c.l.b16 %v1961
    %v1998 = vunpack.c.l.b16 %v1962
    %v1999 = vunpack.c.l.b16 %v1963
    %v2000 = vunpack.c.l.b16 %v1964
    %v2001 = vunpack.c.l.b16 %v1965
    %v2002 = vunpack.c.l.b16 %v1966
    %v2003 = vunpack.c.l.b16 %v1967
    %v2004 = vunpack.c.l.b16 %v1968
    %v2005 = vunpack.c.l.b16 %v1969
    %v2006 = vunpack.c.l.b16 %v1970
    %v2007 = vunpack.c.l.b16 %v1971
    %v2008 = vunpack.c.l.b16 %v1972
    %v2009 = vunpack.c.l.b16 %v1973
    %v2010 = vunpack.c.l.b16 %v1974
    %v2011 = vunpack.c.l.b16 %v1975
    %v2012 = vpack.c.b16 %v1997, %v1996
    %v2013 = vpack.c.b16 %v1999, %v1998
    %v2014 = vpack.c.b16 %v2001, %v2000
    %v2015 = vpack.c.b16 %v2003, %v2002
    %v2016 = vpack.c.b16 %v2005, %v2004
    %v2017 = vpack.c.b16 %v2007, %v2006
    %v2018 = vpack.c.b16 %v2009, %v2008
    %v2019 = vpack.c.b16 %v2011, %v2010
    %2028 = vmatpush.bf16.msra.mxu0 %v2019
    %2029 = vmatpush.bf16.msra.mxu0 %v2018
    %2030 = vmatpush.bf16.msra.mxu0 %v2017
    %2031 = vmatpush.bf16.msra.mxu0 %v2016
    %2032 = vmatpush.bf16.msra.mxu0 %v2015
    %2033 = vmatpush.bf16.msra.mxu0 %v2014
    %2034 = vmatpush.bf16.msra.mxu0 %v2013
    %2035 = vmatpush.bf16.msra.mxu0 %v2012
    %2036 = vmatmul.bf16.gmra.mxu0 %v1959
    %v2037 = vpop.f32.mrf.mxu0
    %v2038 = vadd.f32 %v1978, %v2037
    %v2039 = vpop.f32.mrf.mxu0
    %2040 = vdwg.mxu0
    %2041 = vst [vmem:[#allocation11] sm:$0xff] %v2038
    // Predicated region
    $region50: #{tpu_custom_call.1} parent=1 // pred_check
      _
    $region51: #{tpu_custom_call.1} parent=1 // pred_check_branch
      %2043 = sbr.rel (0) target = $region53
    $region52: #{tpu_custom_call.1} parent=1 // pred_region
      %2045 = vsyncadd [#allocation4], 0
      %s2047 = sshll.u32 [#allocation11], 4
      %s2048 = int_to_ptr.vmem [resolvable:$true] %s2047
      %s2049 = sshll.u32 %s7, 4
      %s2050 = int_to_ptr.hbm [resolvable:$true] %s2049
      %2052 = dma.vmem_to_hbm [thread:$0]  %s2048, 128, %s2050, [#allocation4]
    $region53: #{tpu_custom_call.1} parent=1 // pred_fallthru
      _
    // Predicated region
    $region54: #{tpu_custom_call.1} parent=1 // pred_check
      _
    $region55: #{tpu_custom_call.1} parent=1 // pred_check_branch
      %2054 = sbr.rel (0) target = $region57
    $region56: #{tpu_custom_call.1} parent=1 // pred_region
      %2056 = dma.done [#allocation4], 128
    $region57: #{tpu_custom_call.1} parent=1 // pred_fallthru
      _
    %2057 = vsyncpa [#allocation3], 1
    %2058 = vsyncpa [#allocation6], 1
    %2059 = vsyncpa [#allocation9], 1
    %2060 = vsyncpa [#allocation4], 1

</llo_original>
